<compile_context>
chip_gen: v7x
topology: tpu7x:2x2x1
jax: 0.10.0
libtpu: 0.0.40
codegen_flags: <defaults>
</compile_context>

<pallas_src>
import functools

import jax
import jax.numpy as jnp
from jax.experimental import pallas as pl
from jax.experimental.pallas import tpu as pltpu

BN_EPS = 1e-5      # nn.BatchNorm1d default
GATE_EPS = 1e-6    # from the module's forward


def _silu(x):
    return x * jax.nn.sigmoid(x)


def _batchnorm_train(x, gamma, beta):
    # Training-mode BatchNorm1d, single-pass statistics:
    #   var = E[x^2] - mean^2   (one axis-0 reduction pass instead of two).
    n = x.shape[0]
    s = jnp.sum(x, axis=0, keepdims=True)
    ss = jnp.sum(x * x, axis=0, keepdims=True)
    mean = s * (1.0 / n)
    var = ss * (1.0 / n) - mean * mean
    return gamma * (x - mean) * jax.lax.rsqrt(var + BN_EPS) + beta


def edge_gate_conv_kernel(
    node_ref, edge_ref, sd_ref,
    w_node4_ref, b_node4_ref,
    w_eedge_ref, b_eedge_ref,
    gamma_e_ref, beta_e_ref,
    gamma_n_ref, beta_n_ref,
    node_out_ref, edge_out_ref,
):
    N, F = node_ref.shape

    x_f32 = node_ref[...]                        # [N, F] f32 (residual / BN math)
    ef_f32 = edge_ref[...]                       # [E, F] f32
    SD = sd_ref[...]                             # [E, 2N] bf16 one-hots [S | D]

    # Fused node-side linear; column order [e_src | n_dst | e_dst | n_src].
    node_lin = (
        jnp.dot(x_f32.astype(jnp.bfloat16), w_node4_ref[...],
                preferred_element_type=jnp.float32)
        + b_node4_ref[...]
    )                                            # [N, 4F] f32

    # Fused edge-side gather: LHS = [S | D] (K = 2N), block RHS =
    #   [[e_src | n_dst],
    #    [e_dst |   0  ]]
    # so column block 0 is e_src[src(e)] + e_dst[dst(e)] pre-summed and column
    # block 1 is n_dst[src(e)].  RHS is assembled in f32 ((8,128)-aligned
    # concats) and cast to bf16 once.
    rhs_bot = jnp.concatenate(
        [node_lin[:, 2 * F:3 * F], jnp.zeros((N, F), jnp.float32)], axis=1)
    gather_rhs = jnp.concatenate(
        [node_lin[:, :2 * F], rhs_bot], axis=0).astype(jnp.bfloat16)  # [2N, 2F]
    gathered = jnp.dot(SD, gather_rhs,
                       preferred_element_type=jnp.float32)            # [E, 2F]
    e_nodes_g = gathered[:, :F]                  # e_src[src(e)] + e_dst[dst(e)]
    n_dst_g = gathered[:, F:]                    # n_dst[src(e)]

    # --- edge update ---
    edge_update = (
        jnp.dot(ef_f32.astype(jnp.bfloat16), w_eedge_ref[...],
                preferred_element_type=jnp.float32)
        + b_eedge_ref[...] + e_nodes_g
    )                                            # [E, F] f32
    gate = jax.nn.sigmoid(edge_update)           # [E, F] f32

    # --- node update: gated mean aggregation over incoming edges ---
    msg = n_dst_g * gate                         # [E, F] f32
    # Scatter-sum of both msg and gate in one MXU pass: D^T @ [msg | gate] as
    # a dim-0-contracting dot_general -> [N, 2F] directly (no XLU transposes).
    D_bf = SD[:, N:]                             # [E, N] bf16
    msg_gate = jnp.concatenate([msg, gate], axis=1).astype(jnp.bfloat16)  # [E, 2F]
    scat = jax.lax.dot_general(
        D_bf, msg_gate,
        dimension_numbers=(((0,), (0,)), ((), ())),
        preferred_element_type=jnp.float32)      # [N, 2F]
    n_gate = scat[:, :F] / (scat[:, F:] + GATE_EPS)

    node_update = node_lin[:, 3 * F:] + n_gate   # [N, F] f32 (n_src stays f32)

    # --- batchnorm (training stats) + SiLU + residual (all f32 on VPU/EUP) ---
    edge_out = _silu(_batchnorm_train(edge_update, gamma_e_ref[...],
                                      beta_e_ref[...])) + ef_f32
    node_out = _silu(_batchnorm_train(node_update, gamma_n_ref[...],
                                      beta_n_ref[...])) + x_f32

    node_out_ref[...] = node_out.astype(node_out_ref.dtype)
    edge_out_ref[...] = edge_out.astype(edge_out_ref.dtype)


def init_params(key, feat_length):
    """PyTorch-style deterministic init: U(-1/sqrt(F), 1/sqrt(F)) for linears."""
    F = feat_length
    bound = 1.0 / jnp.sqrt(jnp.float32(F))
    names = ["esrc", "edst", "eedge", "ndst", "nsrc"]
    params = {}
    keys = jax.random.split(key, 2 * len(names))
    for i, n in enumerate(names):
        # weights stored in [in, out] layout (== PyTorch W.T), bias kept 2D [1, F]
        params[f"w_{n}"] = jax.random.uniform(
            keys[2 * i], (F, F), jnp.float32, -bound, bound)
        params[f"b_{n}"] = jax.random.uniform(
            keys[2 * i + 1], (1, F), jnp.float32, -bound, bound)
    params["gamma_e"] = jnp.ones((1, F), jnp.float32)
    params["beta_e"] = jnp.zeros((1, F), jnp.float32)
    params["gamma_n"] = jnp.ones((1, F), jnp.float32)
    params["beta_n"] = jnp.zeros((1, F), jnp.float32)
    return params


@functools.partial(jax.jit, static_argnames=("num_nodes",))
def edge_gate_convolution(node_feats, edge_feats, src, dst, params, *, num_nodes):
    """Runs the module independently on B graphs.

    node_feats: [B, N, F] f32, edge_feats: [B, E, F] f32, src/dst: [B, E] int32.
    Each graph is one grid step (parallel axis); BatchNorm statistics are
    per graph, matching one module forward call per graph.
    """
    B, N, F = node_feats.shape
    E = edge_feats.shape[1]
    assert N == num_nodes

    # bf16 one-hot selectors (exact for 0/1), pre-concatenated -> one DMA and
    # double lane occupancy of the selector operand.
    S = jax.nn.one_hot(src, N, dtype=jnp.bfloat16)     # [B, E, N]
    D = jax.nn.one_hot(dst, N, dtype=jnp.bfloat16)     # [B, E, N]
    SD = jnp.concatenate([S, D], axis=-1)              # [B, E, 2N]

    p = params
    # Fuse the four node-side linears into one lane-dense [F, 4F] weight.
    # Column order: [e_src | n_dst | e_dst | n_src].
    w_node4 = jnp.concatenate(
        [p["w_esrc"], p["w_ndst"], p["w_edst"], p["w_nsrc"]], axis=1
    ).astype(jnp.bfloat16)
    b_node4 = jnp.concatenate(
        [p["b_esrc"], p["b_ndst"], p["b_edst"], p["b_nsrc"]], axis=1)
    w_eedge = p["w_eedge"].astype(jnp.bfloat16)

    # Per-graph VMEM footprint (blocks double-buffered by the pipeline) plus
    # weights and f32 intermediates, with headroom; capped at 75% of the
    # generation's physical VMEM (64 MiB on v7x, 128 MiB on v5e/v6e).
    per_graph_blocks = (
        (N * F + E * F) * 4            # node/edge feature blocks in (f32)
        + E * 2 * N * 2                # SD block (bf16)
        + (N * F + E * F) * 4          # output blocks (f32)
    )
    weight_bytes = 5 * F * F * 2 + (4 * F + F + 4 * F) * 4
    interm_bytes = (N * 8 * F + E * 10 * F) * 4
    bytes_est = 2 * per_graph_blocks + weight_bytes + interm_bytes
    try:
        vmem_cap = pltpu.get_tpu_info().vmem_capacity_bytes
    except Exception:  # pragma: no cover - conservative fallback (v7x size)
        vmem_cap = 64 * 1024 * 1024
    vmem_limit = int(min(max(4 * bytes_est, 32 * 1024 * 1024),
                         (3 * vmem_cap) // 4))
    # TODO(synk): if bytes_est ever exceeds the cap (large graphs), tile the E
    # axis instead of raising the limit.

    shared2d = lambda shape: pl.BlockSpec(shape, lambda b: (0, 0))
    in_specs = [
        pl.BlockSpec((None, N, F), lambda b: (b, 0, 0)),       # node_feats
        pl.BlockSpec((None, E, F), lambda b: (b, 0, 0)),       # edge_feats
        pl.BlockSpec((None, E, 2 * N), lambda b: (b, 0, 0)),   # SD
        shared2d((F, 4 * F)),                                  # w_node4
        shared2d((1, 4 * F)),                                  # b_node4
        shared2d((F, F)),                                      # w_eedge
        shared2d((1, F)),                                      # b_eedge
        shared2d((1, F)), shared2d((1, F)),                    # gamma_e, beta_e
        shared2d((1, F)), shared2d((1, F)),                    # gamma_n, beta_n
    ]
    out_specs = (
        pl.BlockSpec((None, N, F), lambda b: (b, 0, 0)),
        pl.BlockSpec((None, E, F), lambda b: (b, 0, 0)),
    )

    node_out, edge_out = pl.pallas_call(
        edge_gate_conv_kernel,
        out_shape=(
            jax.ShapeDtypeStruct((B, N, F), jnp.float32),
            jax.ShapeDtypeStruct((B, E, F), jnp.float32),
        ),
        grid=(B,),
        in_specs=in_specs,
        out_specs=out_specs,
        compiler_params=pltpu.CompilerParams(
            dimension_semantics=("parallel",),
            vmem_limit_bytes=vmem_limit),
    )(node_feats, edge_feats, SD,
      w_node4, b_node4, w_eedge, p["b_eedge"],
      p["gamma_e"], p["beta_e"], p["gamma_n"], p["beta_n"])
    return node_out, edge_out


def reference_forward(node_feats, edge_feats, src, dst, params):
    """Pure-JAX f32 reference mirroring the PyTorch/DGL forward (one graph)."""
    p = params
    lin = lambda v, w, b: v @ w + b
    e_src = lin(node_feats, p["w_esrc"], p["b_esrc"])
    e_dst = lin(node_feats, p["w_edst"], p["b_edst"])
    e_nodes = e_src[src] + e_dst[dst]
    edge_update = lin(edge_feats, p["w_eedge"], p["b_eedge"]) + e_nodes
    gate = jax.nn.sigmoid(edge_update)
    n_dst = lin(node_feats, p["w_ndst"], p["b_ndst"])
    msg = n_dst[src] * gate
    N = node_feats.shape[0]
    n_gate_1 = jax.ops.segment_sum(msg, dst, num_segments=N)
    n_gate_2 = jax.ops.segment_sum(gate, dst, num_segments=N)
    n_gate = n_gate_1 / (n_gate_2 + GATE_EPS)
    node_update = lin(node_feats, p["w_nsrc"], p["b_nsrc"]) + n_gate

    def bn(x, g, b):
        m = jnp.mean(x, axis=0, keepdims=True)
        v = jnp.mean((x - m) ** 2, axis=0, keepdims=True)
        return g * (x - m) / jnp.sqrt(v + BN_EPS) + b

    silu = lambda x: x * jax.nn.sigmoid(x)
    edge_out = silu(bn(edge_update, p["gamma_e"], p["beta_e"])) + edge_feats
    node_out = silu(bn(node_update, p["gamma_n"], p["beta_n"])) + node_feats
    return node_out, edge_out


if __name__ == "__main__":
    F = 128    # feat_length: multiple of 128 -> lane-dense slices/stores
    N = 8      # nodes per graph
    E = 16     # edges per graph
    B = 4      # independent graphs behind the parallel grid axis

    key = jax.random.PRNGKey(0)
    k_node, k_edge, k_src, k_dst, k_par = jax.random.split(key, 5)

    node_feats = jax.random.normal(k_node, (B, N, F), jnp.float32)
    edge_feats = jax.random.normal(k_edge, (B, E, F), jnp.float32)
    src = jax.random.randint(k_src, (B, E), 0, N, jnp.int32)
    dst = jax.random.randint(k_dst, (B, E), 0, N, jnp.int32)
    params = init_params(k_par, F)

    node_out, edge_out = edge_gate_convolution(
        node_feats, edge_feats, src, dst, params, num_nodes=N)
    jax.block_until_ready((node_out, edge_out))

    ref_node = jnp.stack([reference_forward(node_feats[b], edge_feats[b],
                                            src[b], dst[b], params)[0]
                          for b in range(B)])
    ref_edge = jnp.stack([reference_forward(node_feats[b], edge_feats[b],
                                            src[b], dst[b], params)[1]
                          for b in range(B)])

    # bf16 MXU operands (f32 accumulation) -> relaxed tolerance vs f32 reference.
    assert jnp.allclose(node_out, ref_node, atol=5e-2, rtol=5e-2)
    assert jnp.allclose(edge_out, ref_edge, atol=5e-2, rtol=5e-2)

    print("KERNEL_OK")
</pallas_src>

<mosaic_0001>
module attributes {stable_mosaic.version = 11 : i64} {
  func.func @edge_gate_conv_kernel(%arg0: i32, %arg1: memref<1x8x128xf32, #tpu.memory_space<vmem>>, %arg2: memref<1x16x128xf32, #tpu.memory_space<vmem>>, %arg3: memref<1x16x16xbf16, #tpu.memory_space<vmem>>, %arg4: memref<128x512xbf16, #tpu.memory_space<vmem>>, %arg5: memref<1x512xf32, #tpu.memory_space<vmem>>, %arg6: memref<128x128xbf16, #tpu.memory_space<vmem>>, %arg7: memref<1x128xf32, #tpu.memory_space<vmem>>, %arg8: memref<1x128xf32, #tpu.memory_space<vmem>>, %arg9: memref<1x128xf32, #tpu.memory_space<vmem>>, %arg10: memref<1x128xf32, #tpu.memory_space<vmem>>, %arg11: memref<1x128xf32, #tpu.memory_space<vmem>>, %arg12: memref<1x8x128xf32, #tpu.memory_space<vmem>>, %arg13: memref<1x16x128xf32, #tpu.memory_space<vmem>>) attributes {dimension_semantics = [#tpu.dimension_semantics<parallel>], iteration_bounds = array<i64: 4>, scalar_prefetch = 0 : i64, scratch_operands = 0 : i64, tpu.core_type = #tpu.core_type<tc>, window_params = [{transform_indices = @transform_0, window_bounds = array<i64: 1, 8, 128>}, {transform_indices = @transform_1, window_bounds = array<i64: 1, 16, 128>}, {transform_indices = @transform_2, window_bounds = array<i64: 1, 16, 16>}, {pipeline_mode = #tpu.pipeline_mode<synchronous>, transform_indices = @transform_3, window_bounds = array<i64: 128, 512>}, {pipeline_mode = #tpu.pipeline_mode<synchronous>, transform_indices = @transform_4, window_bounds = array<i64: 1, 512>}, {pipeline_mode = #tpu.pipeline_mode<synchronous>, transform_indices = @transform_5, window_bounds = array<i64: 128, 128>}, {pipeline_mode = #tpu.pipeline_mode<synchronous>, transform_indices = @transform_6, window_bounds = array<i64: 1, 128>}, {pipeline_mode = #tpu.pipeline_mode<synchronous>, transform_indices = @transform_7, window_bounds = array<i64: 1, 128>}, {pipeline_mode = #tpu.pipeline_mode<synchronous>, transform_indices = @transform_8, window_bounds = array<i64: 1, 128>}, {pipeline_mode = #tpu.pipeline_mode<synchronous>, transform_indices = @transform_9, window_bounds = array<i64: 1, 128>}, {pipeline_mode = #tpu.pipeline_mode<synchronous>, transform_indices = @transform_10, window_bounds = array<i64: 1, 128>}, {transform_indices = @transform_11, window_bounds = array<i64: 1, 8, 128>}, {transform_indices = @transform_12, window_bounds = array<i64: 1, 16, 128>}]} {
    %c0 = arith.constant 0 : index
    %c0_0 = arith.constant 0 : index
    %c0_1 = arith.constant 0 : index
    %0 = vector.load %arg1[%c0, %c0_0, %c0_1] : memref<1x8x128xf32, #tpu.memory_space<vmem>>, vector<1x8x128xf32>
    %1 = vector.shape_cast %0 : vector<1x8x128xf32> to vector<8x128xf32>
    %c0_2 = arith.constant 0 : index
    %c0_3 = arith.constant 0 : index
    %c0_4 = arith.constant 0 : index
    %2 = vector.load %arg2[%c0_2, %c0_3, %c0_4] : memref<1x16x128xf32, #tpu.memory_space<vmem>>, vector<1x16x128xf32>
    %3 = vector.shape_cast %2 : vector<1x16x128xf32> to vector<16x128xf32>
    %c0_5 = arith.constant 0 : index
    %c0_6 = arith.constant 0 : index
    %c0_7 = arith.constant 0 : index
    %4 = vector.load %arg3[%c0_5, %c0_6, %c0_7] : memref<1x16x16xbf16, #tpu.memory_space<vmem>>, vector<1x16x16xbf16>
    %5 = vector.shape_cast %4 : vector<1x16x16xbf16> to vector<16x16xbf16>
    %6 = arith.truncf %1 : vector<8x128xf32> to vector<8x128xbf16>
    %c0_8 = arith.constant 0 : index
    %c0_9 = arith.constant 0 : index
    %7 = vector.load %arg4[%c0_8, %c0_9] : memref<128x512xbf16, #tpu.memory_space<vmem>>, vector<128x512xbf16>
    %cst = arith.constant dense<0.000000e+00> : vector<8x512xf32>
    %8 = tpu.matmul %6, %7, %cst {dimension_numbers = #tpu.dot_dimension_numbers<[1], [0], [0], [1], [0, 0, 1, 1], [], []>} : vector<8x128xbf16>, vector<128x512xbf16>, vector<8x512xf32> -> vector<8x512xf32>
    %c0_10 = arith.constant 0 : index
    %c0_11 = arith.constant 0 : index
    %9 = vector.load %arg5[%c0_10, %c0_11] : memref<1x512xf32, #tpu.memory_space<vmem>>, vector<1x512xf32>
    %10 = vector.broadcast %9 : vector<1x512xf32> to vector<8x512xf32>
    %11 = arith.addf %8, %10 : vector<8x512xf32>
    %12 = vector.extract_strided_slice %11 {offsets = [0, 256], sizes = [8, 128], strides = [1, 1]} : vector<8x512xf32> to vector<8x128xf32>
    %cst_12 = arith.constant 0.000000e+00 : f32
    %13 = vector.broadcast %cst_12 : f32 to vector<8x128xf32>
    %14 = tpu.concatenate %12, %13 in 1 : vector<8x128xf32>, vector<8x128xf32> -> vector<8x256xf32>
    %15 = vector.extract_strided_slice %11 {offsets = [0, 0], sizes = [8, 256], strides = [1, 1]} : vector<8x512xf32> to vector<8x256xf32>
    %16 = tpu.concatenate %15, %14 in 0 : vector<8x256xf32>, vector<8x256xf32> -> vector<16x256xf32>
    %17 = arith.truncf %16 : vector<16x256xf32> to vector<16x256xbf16>
    %cst_13 = arith.constant dense<0.000000e+00> : vector<16x256xf32>
    %18 = tpu.matmul %5, %17, %cst_13 {dimension_numbers = #tpu.dot_dimension_numbers<[1], [0], [0], [1], [0, 0, 1, 1], [], []>} : vector<16x16xbf16>, vector<16x256xbf16>, vector<16x256xf32> -> vector<16x256xf32>
    %19 = vector.extract_strided_slice %18 {offsets = [0, 0], sizes = [16, 128], strides = [1, 1]} : vector<16x256xf32> to vector<16x128xf32>
    %20 = vector.extract_strided_slice %18 {offsets = [0, 128], sizes = [16, 128], strides = [1, 1]} : vector<16x256xf32> to vector<16x128xf32>
    %21 = arith.truncf %3 : vector<16x128xf32> to vector<16x128xbf16>
    %c0_14 = arith.constant 0 : index
    %c0_15 = arith.constant 0 : index
    %22 = vector.load %arg6[%c0_14, %c0_15] : memref<128x128xbf16, #tpu.memory_space<vmem>>, vector<128x128xbf16>
    %cst_16 = arith.constant dense<0.000000e+00> : vector<16x128xf32>
    %23 = tpu.matmul %21, %22, %cst_16 {dimension_numbers = #tpu.dot_dimension_numbers<[1], [0], [0], [1], [0, 0, 1, 1], [], []>} : vector<16x128xbf16>, vector<128x128xbf16>, vector<16x128xf32> -> vector<16x128xf32>
    %c0_17 = arith.constant 0 : index
    %c0_18 = arith.constant 0 : index
    %24 = vector.load %arg7[%c0_17, %c0_18] : memref<1x128xf32, #tpu.memory_space<vmem>>, vector<1x128xf32>
    %25 = vector.broadcast %24 : vector<1x128xf32> to vector<16x128xf32>
    %26 = arith.addf %23, %25 : vector<16x128xf32>
    %27 = arith.addf %26, %19 : vector<16x128xf32>
    %28 = arith.negf %27 : vector<16x128xf32>
    %29 = math.exp %28 : vector<16x128xf32>
    %cst_19 = arith.constant 1.000000e+00 : f32
    %30 = vector.broadcast %cst_19 : f32 to vector<16x128xf32>
    %31 = arith.addf %30, %29 : vector<16x128xf32>
    %32 = arith.divf %30, %31 : vector<16x128xf32>
    %33 = arith.mulf %20, %32 : vector<16x128xf32>
    %34 = vector.extract_strided_slice %5 {offsets = [0, 8], sizes = [16, 8], strides = [1, 1]} : vector<16x16xbf16> to vector<16x8xbf16>
    %35 = tpu.concatenate %33, %32 in 1 : vector<16x128xf32>, vector<16x128xf32> -> vector<16x256xf32>
    %36 = arith.truncf %35 : vector<16x256xf32> to vector<16x256xbf16>
    %cst_20 = arith.constant dense<0.000000e+00> : vector<8x256xf32>
    %37 = tpu.matmul %34, %36, %cst_20 {dimension_numbers = #tpu.dot_dimension_numbers<[0], [0], [1], [1], [0, 1, 1, 1], [], []>} : vector<16x8xbf16>, vector<16x256xbf16>, vector<8x256xf32> -> vector<8x256xf32>
    %38 = vector.extract_strided_slice %37 {offsets = [0, 0], sizes = [8, 128], strides = [1, 1]} : vector<8x256xf32> to vector<8x128xf32>
    %39 = vector.extract_strided_slice %37 {offsets = [0, 128], sizes = [8, 128], strides = [1, 1]} : vector<8x256xf32> to vector<8x128xf32>
    %cst_21 = arith.constant 9.99999997E-7 : f32
    %40 = vector.broadcast %cst_21 : f32 to vector<8x128xf32>
    %41 = arith.addf %39, %40 : vector<8x128xf32>
    %42 = arith.divf %38, %41 : vector<8x128xf32>
    %43 = vector.extract_strided_slice %11 {offsets = [0, 384], sizes = [8, 128], strides = [1, 1]} : vector<8x512xf32> to vector<8x128xf32>
    %44 = arith.addf %43, %42 : vector<8x128xf32>
    %c0_22 = arith.constant 0 : index
    %c0_23 = arith.constant 0 : index
    %45 = vector.load %arg8[%c0_22, %c0_23] : memref<1x128xf32, #tpu.memory_space<vmem>>, vector<1x128xf32>
    %c0_24 = arith.constant 0 : index
    %c0_25 = arith.constant 0 : index
    %46 = vector.load %arg9[%c0_24, %c0_25] : memref<1x128xf32, #tpu.memory_space<vmem>>, vector<1x128xf32>
    %cst_26 = arith.constant dense<0.000000e+00> : vector<128xf32>
    %47 = vector.multi_reduction <add>, %27, %cst_26 [0] : vector<16x128xf32> to vector<128xf32>
    %48 = vector.shape_cast %47 : vector<128xf32> to vector<1x128xf32>
    %49 = arith.mulf %27, %27 : vector<16x128xf32>
    %cst_27 = arith.constant dense<0.000000e+00> : vector<128xf32>
    %50 = vector.multi_reduction <add>, %49, %cst_27 [0] : vector<16x128xf32> to vector<128xf32>
    %51 = vector.shape_cast %50 : vector<128xf32> to vector<1x128xf32>
    %cst_28 = arith.constant 6.250000e-02 : f32
    %52 = vector.broadcast %cst_28 : f32 to vector<1x128xf32>
    %53 = arith.mulf %48, %52 : vector<1x128xf32>
    %cst_29 = arith.constant 6.250000e-02 : f32
    %54 = vector.broadcast %cst_29 : f32 to vector<1x128xf32>
    %55 = arith.mulf %51, %54 : vector<1x128xf32>
    %56 = arith.mulf %53, %53 : vector<1x128xf32>
    %57 = arith.subf %55, %56 : vector<1x128xf32>
    %58 = vector.broadcast %53 : vector<1x128xf32> to vector<16x128xf32>
    %59 = arith.subf %27, %58 : vector<16x128xf32>
    %60 = vector.broadcast %45 : vector<1x128xf32> to vector<16x128xf32>
    %61 = arith.mulf %60, %59 : vector<16x128xf32>
    %cst_30 = arith.constant 9.99999974E-6 : f32
    %62 = vector.broadcast %cst_30 : f32 to vector<1x128xf32>
    %63 = arith.addf %57, %62 : vector<1x128xf32>
    %64 = math.rsqrt %63 : vector<1x128xf32>
    %65 = vector.broadcast %64 : vector<1x128xf32> to vector<16x128xf32>
    %66 = arith.mulf %61, %65 : vector<16x128xf32>
    %67 = vector.broadcast %46 : vector<1x128xf32> to vector<16x128xf32>
    %68 = arith.addf %66, %67 : vector<16x128xf32>
    %69 = arith.negf %68 : vector<16x128xf32>
    %70 = math.exp %69 : vector<16x128xf32>
    %cst_31 = arith.constant 1.000000e+00 : f32
    %71 = vector.broadcast %cst_31 : f32 to vector<16x128xf32>
    %72 = arith.addf %71, %70 : vector<16x128xf32>
    %73 = arith.divf %71, %72 : vector<16x128xf32>
    %74 = arith.mulf %68, %73 : vector<16x128xf32>
    %75 = arith.addf %74, %3 : vector<16x128xf32>
    %c0_32 = arith.constant 0 : index
    %c0_33 = arith.constant 0 : index
    %76 = vector.load %arg10[%c0_32, %c0_33] : memref<1x128xf32, #tpu.memory_space<vmem>>, vector<1x128xf32>
    %c0_34 = arith.constant 0 : index
    %c0_35 = arith.constant 0 : index
    %77 = vector.load %arg11[%c0_34, %c0_35] : memref<1x128xf32, #tpu.memory_space<vmem>>, vector<1x128xf32>
    %cst_36 = arith.constant dense<0.000000e+00> : vector<128xf32>
    %78 = vector.multi_reduction <add>, %44, %cst_36 [0] : vector<8x128xf32> to vector<128xf32>
    %79 = vector.shape_cast %78 : vector<128xf32> to vector<1x128xf32>
    %80 = arith.mulf %44, %44 : vector<8x128xf32>
    %cst_37 = arith.constant dense<0.000000e+00> : vector<128xf32>
    %81 = vector.multi_reduction <add>, %80, %cst_37 [0] : vector<8x128xf32> to vector<128xf32>
    %82 = vector.shape_cast %81 : vector<128xf32> to vector<1x128xf32>
    %cst_38 = arith.constant 1.250000e-01 : f32
    %83 = vector.broadcast %cst_38 : f32 to vector<1x128xf32>
    %84 = arith.mulf %79, %83 : vector<1x128xf32>
    %cst_39 = arith.constant 1.250000e-01 : f32
    %85 = vector.broadcast %cst_39 : f32 to vector<1x128xf32>
    %86 = arith.mulf %82, %85 : vector<1x128xf32>
    %87 = arith.mulf %84, %84 : vector<1x128xf32>
    %88 = arith.subf %86, %87 : vector<1x128xf32>
    %89 = vector.broadcast %84 : vector<1x128xf32> to vector<8x128xf32>
    %90 = arith.subf %44, %89 : vector<8x128xf32>
    %91 = vector.broadcast %76 : vector<1x128xf32> to vector<8x128xf32>
    %92 = arith.mulf %91, %90 : vector<8x128xf32>
    %cst_40 = arith.constant 9.99999974E-6 : f32
    %93 = vector.broadcast %cst_40 : f32 to vector<1x128xf32>
    %94 = arith.addf %88, %93 : vector<1x128xf32>
    %95 = math.rsqrt %94 : vector<1x128xf32>
    %96 = vector.broadcast %95 : vector<1x128xf32> to vector<8x128xf32>
    %97 = arith.mulf %92, %96 : vector<8x128xf32>
    %98 = vector.broadcast %77 : vector<1x128xf32> to vector<8x128xf32>
    %99 = arith.addf %97, %98 : vector<8x128xf32>
    %100 = arith.negf %99 : vector<8x128xf32>
    %101 = math.exp %100 : vector<8x128xf32>
    %cst_41 = arith.constant 1.000000e+00 : f32
    %102 = vector.broadcast %cst_41 : f32 to vector<8x128xf32>
    %103 = arith.addf %102, %101 : vector<8x128xf32>
    %104 = arith.divf %102, %103 : vector<8x128xf32>
    %105 = arith.mulf %99, %104 : vector<8x128xf32>
    %106 = arith.addf %105, %1 : vector<8x128xf32>
    %c0_42 = arith.constant 0 : index
    %c0_43 = arith.constant 0 : index
    %c0_44 = arith.constant 0 : index
    %107 = vector.load %arg12[%c0_42, %c0_43, %c0_44] : memref<1x8x128xf32, #tpu.memory_space<vmem>>, vector<1x8x128xf32>
    %108 = vector.shape_cast %107 : vector<1x8x128xf32> to vector<8x128xf32>
    %109 = vector.shape_cast %106 : vector<8x128xf32> to vector<1x8x128xf32>
    tpu.vector_store %arg12[%c0_42, %c0_43, %c0_44], %109 {strides = array<i32>} : memref<1x8x128xf32, #tpu.memory_space<vmem>>, vector<1x8x128xf32>,
    %c0_45 = arith.constant 0 : index
    %c0_46 = arith.constant 0 : index
    %c0_47 = arith.constant 0 : index
    %110 = vector.load %arg13[%c0_45, %c0_46, %c0_47] : memref<1x16x128xf32, #tpu.memory_space<vmem>>, vector<1x16x128xf32>
    %111 = vector.shape_cast %110 : vector<1x16x128xf32> to vector<16x128xf32>
    %112 = vector.shape_cast %75 : vector<16x128xf32> to vector<1x16x128xf32>
    tpu.vector_store %arg13[%c0_45, %c0_46, %c0_47], %112 {strides = array<i32>} : memref<1x16x128xf32, #tpu.memory_space<vmem>>, vector<1x16x128xf32>,
    return
  }
  func.func @transform_0(%arg0: i32) -> (i32, i32, i32) {
    %c0_i32 = arith.constant 0 : i32
    %c0_i32_0 = arith.constant 0 : i32
    %c0_i32_1 = arith.constant 0 : i32
    return %arg0, %c0_i32, %c0_i32_0 : i32, i32, i32
  }
  func.func @transform_1(%arg0: i32) -> (i32, i32, i32) {
    %c0_i32 = arith.constant 0 : i32
    %c0_i32_0 = arith.constant 0 : i32
    %c0_i32_1 = arith.constant 0 : i32
    return %arg0, %c0_i32, %c0_i32_0 : i32, i32, i32
  }
  func.func @transform_2(%arg0: i32) -> (i32, i32, i32) {
    %c0_i32 = arith.constant 0 : i32
    %c0_i32_0 = arith.constant 0 : i32
    %c0_i32_1 = arith.constant 0 : i32
    return %arg0, %c0_i32, %c0_i32_0 : i32, i32, i32
  }
  func.func @transform_3(%arg0: i32) -> (i32, i32) {
    %c0_i32 = arith.constant 0 : i32
    %c0_i32_0 = arith.constant 0 : i32
    %c0_i32_1 = arith.constant 0 : i32
    return %c0_i32, %c0_i32_0 : i32, i32
  }
  func.func @transform_4(%arg0: i32) -> (i32, i32) {
    %c0_i32 = arith.constant 0 : i32
    %c0_i32_0 = arith.constant 0 : i32
    %c0_i32_1 = arith.constant 0 : i32
    return %c0_i32, %c0_i32_0 : i32, i32
  }
  func.func @transform_5(%arg0: i32) -> (i32, i32) {
    %c0_i32 = arith.constant 0 : i32
    %c0_i32_0 = arith.constant 0 : i32
    %c0_i32_1 = arith.constant 0 : i32
    return %c0_i32, %c0_i32_0 : i32, i32
  }
  func.func @transform_6(%arg0: i32) -> (i32, i32) {
    %c0_i32 = arith.constant 0 : i32
    %c0_i32_0 = arith.constant 0 : i32
    %c0_i32_1 = arith.constant 0 : i32
    return %c0_i32, %c0_i32_0 : i32, i32
  }
  func.func @transform_7(%arg0: i32) -> (i32, i32) {
    %c0_i32 = arith.constant 0 : i32
    %c0_i32_0 = arith.constant 0 : i32
    %c0_i32_1 = arith.constant 0 : i32
    return %c0_i32, %c0_i32_0 : i32, i32
  }
  func.func @transform_8(%arg0: i32) -> (i32, i32) {
    %c0_i32 = arith.constant 0 : i32
    %c0_i32_0 = arith.constant 0 : i32
    %c0_i32_1 = arith.constant 0 : i32
    return %c0_i32, %c0_i32_0 : i32, i32
  }
  func.func @transform_9(%arg0: i32) -> (i32, i32) {
    %c0_i32 = arith.constant 0 : i32
    %c0_i32_0 = arith.constant 0 : i32
    %c0_i32_1 = arith.constant 0 : i32
    return %c0_i32, %c0_i32_0 : i32, i32
  }
  func.func @transform_10(%arg0: i32) -> (i32, i32) {
    %c0_i32 = arith.constant 0 : i32
    %c0_i32_0 = arith.constant 0 : i32
    %c0_i32_1 = arith.constant 0 : i32
    return %c0_i32, %c0_i32_0 : i32, i32
  }
  func.func @transform_11(%arg0: i32) -> (i32, i32, i32) {
    %c0_i32 = arith.constant 0 : i32
    %c0_i32_0 = arith.constant 0 : i32
    %c0_i32_1 = arith.constant 0 : i32
    return %arg0, %c0_i32, %c0_i32_0 : i32, i32, i32
  }
  func.func @transform_12(%arg0: i32) -> (i32, i32, i32) {
    %c0_i32 = arith.constant 0 : i32
    %c0_i32_0 = arith.constant 0 : i32
    %c0_i32_1 = arith.constant 0 : i32
    return %arg0, %c0_i32, %c0_i32_0 : i32, i32, i32
  }
}

</mosaic_0001>

<llo_original>
// kernel: edge_gate_convolution.1
$region0: #{edge_gate_convolution.1}
  #allocation0 [shape = 'u32[]', space=smem, size = 0x4, offset = 0x4, fixed_abs, tag = 'smem constant byte address 0x4 - core index']
  #allocation1 [shape = 'u32[144,128]{1,0:T(1,128)}', space=vmem, size = 0x12000, scoped, tag = 'internal scratch']
  %s0 = inlined_call_operand.vmem [shape: f32[4,8,128], index: 0, kind: input, shape index: {}]
  %s1 = inlined_call_operand.vmem [shape: f32[4,16,128], index: 1, kind: input, shape index: {}]
  %s2 = inlined_call_operand.vmem [shape: bf16[4,16,16], index: 2, kind: input, shape index: {}]
  %s3 = inlined_call_operand.vmem [shape: bf16[128,512], index: 3, kind: input, shape index: {}]
  %s4 = inlined_call_operand.vmem [shape: f32[1,512], index: 4, kind: input, shape index: {}]
  %s5 = inlined_call_operand.vmem [shape: bf16[128,128], index: 5, kind: input, shape index: {}]
  %s6 = inlined_call_operand.vmem [shape: f32[1,128], index: 6, kind: input, shape index: {}]
  %s7 = inlined_call_operand.vmem [shape: f32[1,128], index: 7, kind: input, shape index: {}]
  %s8 = inlined_call_operand.vmem [shape: f32[1,128], index: 8, kind: input, shape index: {}]
  %s9 = inlined_call_operand.vmem [shape: f32[1,128], index: 9, kind: input, shape index: {}]
  %s10 = inlined_call_operand.vmem [shape: f32[1,128], index: 10, kind: input, shape index: {}]
  %s11 = inlined_call_operand.hbm [shape: f32[4,8,128], index: 11, kind: output, shape index: {0}]
  %s12 = inlined_call_operand.hbm [shape: f32[4,16,128], index: 12, kind: output, shape index: {1}]
  %13 = xla_tuple %s11, %s12
  %s14 = sld [smem:[#allocation0]]
  $region85: #{edge_gate_convolution.1} parent=0
    _
  %s16 = ssub.s32 1, %s14
  %s17 = scalar_select 0, %s16, %s14
  $region1: #{edge_gate_convolution.1} parent=0
    #allocation2 [shape = 'u8[8192]{0}', space=vmem, size = 0x2000, scoped, tag = 'output window, operand 0']
    #allocation3 [shape = 's32[2]{0}', space=sflag, size = 0x8, scoped, tag = 'scoped memory for edge_gate_convolution.1']
    #allocation4 [shape = 'u8[16384]{0}', space=vmem, size = 0x4000, scoped, tag = 'output window, operand 1']
    #allocation5 [shape = 's32[2]{0}', space=sflag, size = 0x8, scoped, tag = 'scoped memory for edge_gate_convolution.1']
    %18 = vsyncpa [#allocation3], 0
    %s19 = scalar_lea.sflag [#allocation3], 1
    %20 = vsyncpa %s19, 0
    %21 = vsyncpa [#allocation5], 0
    %s22 = scalar_lea.sflag [#allocation5], 1
    %23 = vsyncpa %s22, 0
    loop: start=0, step=1, limit=6
    $region2: #{edge_gate_convolution.1} parent=1 // loop_pre_header
      _
    $region3: #{edge_gate_convolution.1} parent=1 // loop_header
      %s25 = sphi 0, %s29
      %p26 = scmp.ge.s32.totalorder %s25, 6
      %s35 = sphi 0, %s37
      %s38 = sphi 0, %s35
      %s39 = sphi 0, %s38
      %s55 = sphi 0, %s39
      %s61 = sphi 0, %s63
      %s64 = sphi 0, %s61
      %s65 = sphi 0, %s64
      %s81 = sphi 0, %s65
      %s87 = sphi 0, %s89
      %s90 = sphi 0, %s87
      %s91 = sphi 0, %s90
      %s107 = sphi 0, %s91
      %s111 = sphi 0, %s111
      %s113 = sphi 0, %s111
      %s114 = sphi 0, %s113
      %s128 = sphi 0, %s114
      %s132 = sphi 0, %s132
      %s134 = sphi 0, %s132
      %s135 = sphi 0, %s134
      %s149 = sphi 0, %s135
      %s153 = sphi 0, %s153
      %s155 = sphi 0, %s153
      %s156 = sphi 0, %s155
      %s170 = sphi 0, %s156
      %s174 = sphi 0, %s174
      %s176 = sphi 0, %s174
      %s177 = sphi 0, %s176
      %s191 = sphi 0, %s177
      %s195 = sphi 0, %s195
      %s197 = sphi 0, %s195
      %s198 = sphi 0, %s197
      %s212 = sphi 0, %s198
      %s216 = sphi 0, %s216
      %s218 = sphi 0, %s216
      %s219 = sphi 0, %s218
      %s233 = sphi 0, %s219
      %s237 = sphi 0, %s237
      %s239 = sphi 0, %s237
      %s240 = sphi 0, %s239
      %s254 = sphi 0, %s240
      %s258 = sphi 0, %s258
      %s260 = sphi 0, %s258
      %s261 = sphi 0, %s260
      %s275 = sphi 0, %s261
      %s281 = sphi 0, %s283
      %s284 = sphi 0, %s281
      %s285 = sphi 0, %s284
      %s301 = sphi 0, %s285
      %s307 = sphi 0, %s309
      %s310 = sphi 0, %s307
      %s311 = sphi 0, %s310
      %s327 = sphi 0, %s311
    $region4: #{edge_gate_convolution.1} parent=1 // loop_header_branch
      %28 = sbr.rel (%p26) target = $region8
    $region5: #{edge_gate_convolution.1} parent=1 // loop_body
      %s30 = ssub.s32 %s25, 1
      %s31 = ssub.s32 %s25, 2
      %s32 = sadd.s32 %s25, 1
      %s33 = ssub.s32 %s25, %s32
      %p34 = scmp.eq.s32.totalorder %s33, 0
      %s36 = sadd.s32 %s35, 1
      %s37 = scalar_select %p34, %s35, %s36
      %p40 = pneg %p34
      %p41 = scmp.eq.s32.totalorder %s25, 3
      %p42 = por %p40, %p41
      %p43 = scmp.ne.s32.totalorder %s35, %s38
      %p44 = scmp.eq.s32.totalorder %s25, 0
      %p45 = por %p43, %p44
      %p46 = scmp.ne.s32.totalorder %s35, %s38
      %p47 = scmp.eq.s32.totalorder %s30, 3
      %p48 = por %p46, %p47
      %p49 = scmp.ne.s32.totalorder %s38, %s39
      %p50 = scmp.eq.s32.totalorder %s30, 0
      %p51 = por %p49, %p50
      %p52 = scmp.ne.s32.totalorder %s38, %s39
      %p53 = scmp.eq.s32.totalorder %s31, 3
      %p54 = por %p52, %p53
      %p56 = scmp.ne.s32.totalorder %s39, %s55
      %p57 = scmp.eq.s32.totalorder %s31, 0
      %p58 = por %p56, %p57
      %s59 = ssub.s32 %s25, %s32
      %p60 = scmp.eq.s32.totalorder %s59, 0
      %s62 = sadd.s32 %s61, 1
      %s63 = scalar_select %p60, %s61, %s62
      %p66 = pneg %p60
      %p67 = scmp.eq.s32.totalorder %s25, 3
      %p68 = por %p66, %p67
      %p69 = scmp.ne.s32.totalorder %s61, %s64
      %p70 = scmp.eq.s32.totalorder %s25, 0
      %p71 = por %p69, %p70
      %p72 = scmp.ne.s32.totalorder %s61, %s64
      %p73 = scmp.eq.s32.totalorder %s30, 3
      %p74 = por %p72, %p73
      %p75 = scmp.ne.s32.totalorder %s64, %s65
      %p76 = scmp.eq.s32.totalorder %s30, 0
      %p77 = por %p75, %p76
      %p78 = scmp.ne.s32.totalorder %s64, %s65
      %p79 = scmp.eq.s32.totalorder %s31, 3
      %p80 = por %p78, %p79
      %p82 = scmp.ne.s32.totalorder %s65, %s81
      %p83 = scmp.eq.s32.totalorder %s31, 0
      %p84 = por %p82, %p83
      %s85 = ssub.s32 %s25, %s32
      %p86 = scmp.eq.s32.totalorder %s85, 0
      %s88 = sadd.s32 %s87, 1
      %s89 = scalar_select %p86, %s87, %s88
      %p92 = pneg %p86
      %p93 = scmp.eq.s32.totalorder %s25, 3
      %p94 = por %p92, %p93
      %p95 = scmp.ne.s32.totalorder %s87, %s90
      %p96 = scmp.eq.s32.totalorder %s25, 0
      %p97 = por %p95, %p96
      %p98 = scmp.ne.s32.totalorder %s87, %s90
      %p99 = scmp.eq.s32.totalorder %s30, 3
      %p100 = por %p98, %p99
      %p101 = scmp.ne.s32.totalorder %s90, %s91
      %p102 = scmp.eq.s32.totalorder %s30, 0
      %p103 = por %p101, %p102
      %p104 = scmp.ne.s32.totalorder %s90, %s91
      %p105 = scmp.eq.s32.totalorder %s31, 3
      %p106 = por %p104, %p105
      %p108 = scmp.ne.s32.totalorder %s91, %s107
      %p109 = scmp.eq.s32.totalorder %s31, 0
      %p110 = por %p108, %p109
      %s112 = sadd.s32 %s111, 1
      %p115 = scmp.eq.s32.totalorder %s25, 3
      %p116 = scmp.ne.s32.totalorder %s111, %s113
      %p117 = scmp.eq.s32.totalorder %s25, 0
      %p118 = por %p116, %p117
      %p119 = scmp.ne.s32.totalorder %s111, %s113
      %p120 = scmp.eq.s32.totalorder %s30, 3
      %p121 = por %p119, %p120
      %p122 = scmp.ne.s32.totalorder %s113, %s114
      %p123 = scmp.eq.s32.totalorder %s30, 0
      %p124 = por %p122, %p123
      %p125 = scmp.ne.s32.totalorder %s113, %s114
      %p126 = scmp.eq.s32.totalorder %s31, 3
      %p127 = por %p125, %p126
      %p129 = scmp.ne.s32.totalorder %s114, %s128
      %p130 = scmp.eq.s32.totalorder %s31, 0
      %p131 = por %p129, %p130
      %s133 = sadd.s32 %s132, 1
      %p136 = scmp.eq.s32.totalorder %s25, 3
      %p137 = scmp.ne.s32.totalorder %s132, %s134
      %p138 = scmp.eq.s32.totalorder %s25, 0
      %p139 = por %p137, %p138
      %p140 = scmp.ne.s32.totalorder %s132, %s134
      %p141 = scmp.eq.s32.totalorder %s30, 3
      %p142 = por %p140, %p141
      %p143 = scmp.ne.s32.totalorder %s134, %s135
      %p144 = scmp.eq.s32.totalorder %s30, 0
      %p145 = por %p143, %p144
      %p146 = scmp.ne.s32.totalorder %s134, %s135
      %p147 = scmp.eq.s32.totalorder %s31, 3
      %p148 = por %p146, %p147
      %p150 = scmp.ne.s32.totalorder %s135, %s149
      %p151 = scmp.eq.s32.totalorder %s31, 0
      %p152 = por %p150, %p151
      %s154 = sadd.s32 %s153, 1
      %p157 = scmp.eq.s32.totalorder %s25, 3
      %p158 = scmp.ne.s32.totalorder %s153, %s155
      %p159 = scmp.eq.s32.totalorder %s25, 0
      %p160 = por %p158, %p159
      %p161 = scmp.ne.s32.totalorder %s153, %s155
      %p162 = scmp.eq.s32.totalorder %s30, 3
      %p163 = por %p161, %p162
      %p164 = scmp.ne.s32.totalorder %s155, %s156
      %p165 = scmp.eq.s32.totalorder %s30, 0
      %p166 = por %p164, %p165
      %p167 = scmp.ne.s32.totalorder %s155, %s156
      %p168 = scmp.eq.s32.totalorder %s31, 3
      %p169 = por %p167, %p168
      %p171 = scmp.ne.s32.totalorder %s156, %s170
      %p172 = scmp.eq.s32.totalorder %s31, 0
      %p173 = por %p171, %p172
      %s175 = sadd.s32 %s174, 1
      %p178 = scmp.eq.s32.totalorder %s25, 3
      %p179 = scmp.ne.s32.totalorder %s174, %s176
      %p180 = scmp.eq.s32.totalorder %s25, 0
      %p181 = por %p179, %p180
      %p182 = scmp.ne.s32.totalorder %s174, %s176
      %p183 = scmp.eq.s32.totalorder %s30, 3
      %p184 = por %p182, %p183
      %p185 = scmp.ne.s32.totalorder %s176, %s177
      %p186 = scmp.eq.s32.totalorder %s30, 0
      %p187 = por %p185, %p186
      %p188 = scmp.ne.s32.totalorder %s176, %s177
      %p189 = scmp.eq.s32.totalorder %s31, 3
      %p190 = por %p188, %p189
      %p192 = scmp.ne.s32.totalorder %s177, %s191
      %p193 = scmp.eq.s32.totalorder %s31, 0
      %p194 = por %p192, %p193
      %s196 = sadd.s32 %s195, 1
      %p199 = scmp.eq.s32.totalorder %s25, 3
      %p200 = scmp.ne.s32.totalorder %s195, %s197
      %p201 = scmp.eq.s32.totalorder %s25, 0
      %p202 = por %p200, %p201
      %p203 = scmp.ne.s32.totalorder %s195, %s197
      %p204 = scmp.eq.s32.totalorder %s30, 3
      %p205 = por %p203, %p204
      %p206 = scmp.ne.s32.totalorder %s197, %s198
      %p207 = scmp.eq.s32.totalorder %s30, 0
      %p208 = por %p206, %p207
      %p209 = scmp.ne.s32.totalorder %s197, %s198
      %p210 = scmp.eq.s32.totalorder %s31, 3
      %p211 = por %p209, %p210
      %p213 = scmp.ne.s32.totalorder %s198, %s212
      %p214 = scmp.eq.s32.totalorder %s31, 0
      %p215 = por %p213, %p214
      %s217 = sadd.s32 %s216, 1
      %p220 = scmp.eq.s32.totalorder %s25, 3
      %p221 = scmp.ne.s32.totalorder %s216, %s218
      %p222 = scmp.eq.s32.totalorder %s25, 0
      %p223 = por %p221, %p222
      %p224 = scmp.ne.s32.totalorder %s216, %s218
      %p225 = scmp.eq.s32.totalorder %s30, 3
      %p226 = por %p224, %p225
      %p227 = scmp.ne.s32.totalorder %s218, %s219
      %p228 = scmp.eq.s32.totalorder %s30, 0
      %p229 = por %p227, %p228
      %p230 = scmp.ne.s32.totalorder %s218, %s219
      %p231 = scmp.eq.s32.totalorder %s31, 3
      %p232 = por %p230, %p231
      %p234 = scmp.ne.s32.totalorder %s219, %s233
      %p235 = scmp.eq.s32.totalorder %s31, 0
      %p236 = por %p234, %p235
      %s238 = sadd.s32 %s237, 1
      %p241 = scmp.eq.s32.totalorder %s25, 3
      %p242 = scmp.ne.s32.totalorder %s237, %s239
      %p243 = scmp.eq.s32.totalorder %s25, 0
      %p244 = por %p242, %p243
      %p245 = scmp.ne.s32.totalorder %s237, %s239
      %p246 = scmp.eq.s32.totalorder %s30, 3
      %p247 = por %p245, %p246
      %p248 = scmp.ne.s32.totalorder %s239, %s240
      %p249 = scmp.eq.s32.totalorder %s30, 0
      %p250 = por %p248, %p249
      %p251 = scmp.ne.s32.totalorder %s239, %s240
      %p252 = scmp.eq.s32.totalorder %s31, 3
      %p253 = por %p251, %p252
      %p255 = scmp.ne.s32.totalorder %s240, %s254
      %p256 = scmp.eq.s32.totalorder %s31, 0
      %p257 = por %p255, %p256
      %s259 = sadd.s32 %s258, 1
      %p262 = scmp.eq.s32.totalorder %s25, 3
      %p263 = scmp.ne.s32.totalorder %s258, %s260
      %p264 = scmp.eq.s32.totalorder %s25, 0
      %p265 = por %p263, %p264
      %p266 = scmp.ne.s32.totalorder %s258, %s260
      %p267 = scmp.eq.s32.totalorder %s30, 3
      %p268 = por %p266, %p267
      %p269 = scmp.ne.s32.totalorder %s260, %s261
      %p270 = scmp.eq.s32.totalorder %s30, 0
      %p271 = por %p269, %p270
      %p272 = scmp.ne.s32.totalorder %s260, %s261
      %p273 = scmp.eq.s32.totalorder %s31, 3
      %p274 = por %p272, %p273
      %p276 = scmp.ne.s32.totalorder %s261, %s275
      %p277 = scmp.eq.s32.totalorder %s31, 0
      %p278 = por %p276, %p277
      %s279 = ssub.s32 %s25, %s32
      %p280 = scmp.eq.s32.totalorder %s279, 0
      %s282 = sadd.s32 %s281, 1
      %s283 = scalar_select %p280, %s281, %s282
      %p286 = pneg %p280
      %p287 = scmp.eq.s32.totalorder %s25, 3
      %p288 = por %p286, %p287
      %p289 = scmp.ne.s32.totalorder %s281, %s284
      %p290 = scmp.eq.s32.totalorder %s25, 0
      %p291 = por %p289, %p290
      %p292 = scmp.ne.s32.totalorder %s281, %s284
      %p293 = scmp.eq.s32.totalorder %s30, 3
      %p294 = por %p292, %p293
      %p295 = scmp.ne.s32.totalorder %s284, %s285
      %p296 = scmp.eq.s32.totalorder %s30, 0
      %p297 = por %p295, %p296
      %p298 = scmp.ne.s32.totalorder %s284, %s285
      %p299 = scmp.eq.s32.totalorder %s31, 3
      %p300 = por %p298, %p299
      %p302 = scmp.ne.s32.totalorder %s285, %s301
      %p303 = scmp.eq.s32.totalorder %s31, 0
      %p304 = por %p302, %p303
      %s305 = ssub.s32 %s25, %s32
      %p306 = scmp.eq.s32.totalorder %s305, 0
      %s308 = sadd.s32 %s307, 1
      %s309 = scalar_select %p306, %s307, %s308
      %p312 = pneg %p306
      %p313 = scmp.eq.s32.totalorder %s25, 3
      %p314 = por %p312, %p313
      %p315 = scmp.ne.s32.totalorder %s307, %s310
      %p316 = scmp.eq.s32.totalorder %s25, 0
      %p317 = por %p315, %p316
      %p318 = scmp.ne.s32.totalorder %s307, %s310
      %p319 = scmp.eq.s32.totalorder %s30, 3
      %p320 = por %p318, %p319
      %p321 = scmp.ne.s32.totalorder %s310, %s311
      %p322 = scmp.eq.s32.totalorder %s30, 0
      %p323 = por %p321, %p322
      %p324 = scmp.ne.s32.totalorder %s310, %s311
      %p325 = scmp.eq.s32.totalorder %s31, 3
      %p326 = por %p324, %p325
      %p328 = scmp.ne.s32.totalorder %s311, %s327
      %p329 = scmp.eq.s32.totalorder %s31, 0
      %p330 = por %p328, %p329
      %p331 = scmp.le.s32.totalorder 1, %s25
      %p332 = scmp.lt.s32.totalorder %s25, 5
      %p333 = pnand %p331, %p332
      %p334 = pneg %p333
      // Predicated region
      $region9: #{edge_gate_convolution.1} parent=5 // pred_check
        _
      $region10: #{edge_gate_convolution.1} parent=5 // pred_check_branch
        %336 = sbr.rel (%p333) target = $region12
      $region11: #{edge_gate_convolution.1} parent=5 // pred_region
        %s337 = ssub.s32 %s25, 1
        // Predicated region
        $region13: #{edge_gate_convolution.1} parent=11 // pred_check
          %p338 = pneg %p124
        $region14: #{edge_gate_convolution.1} parent=11 // pred_check_branch
          %340 = sbr.rel (%p338) target = $region16
        $region15: #{edge_gate_convolution.1} parent=11 // pred_region
          _
        $region16: #{edge_gate_convolution.1} parent=11 // pred_fallthru
          _
        // Predicated region
        $region17: #{edge_gate_convolution.1} parent=11 // pred_check
          %p341 = pneg %p145
        $region18: #{edge_gate_convolution.1} parent=11 // pred_check_branch
          %343 = sbr.rel (%p341) target = $region20
        $region19: #{edge_gate_convolution.1} parent=11 // pred_region
          _
        $region20: #{edge_gate_convolution.1} parent=11 // pred_fallthru
          _
        // Predicated region
        $region21: #{edge_gate_convolution.1} parent=11 // pred_check
          %p344 = pneg %p166
        $region22: #{edge_gate_convolution.1} parent=11 // pred_check_branch
          %346 = sbr.rel (%p344) target = $region24
        $region23: #{edge_gate_convolution.1} parent=11 // pred_region
          _
        $region24: #{edge_gate_convolution.1} parent=11 // pred_fallthru
          _
        // Predicated region
        $region25: #{edge_gate_convolution.1} parent=11 // pred_check
          %p347 = pneg %p187
        $region26: #{edge_gate_convolution.1} parent=11 // pred_check_branch
          %349 = sbr.rel (%p347) target = $region28
        $region27: #{edge_gate_convolution.1} parent=11 // pred_region
          _
        $region28: #{edge_gate_convolution.1} parent=11 // pred_fallthru
          _
        // Predicated region
        $region29: #{edge_gate_convolution.1} parent=11 // pred_check
          %p350 = pneg %p208
        $region30: #{edge_gate_convolution.1} parent=11 // pred_check_branch
          %352 = sbr.rel (%p350) target = $region32
        $region31: #{edge_gate_convolution.1} parent=11 // pred_region
          _
        $region32: #{edge_gate_convolution.1} parent=11 // pred_fallthru
          _
        // Predicated region
        $region33: #{edge_gate_convolution.1} parent=11 // pred_check
          %p353 = pneg %p229
        $region34: #{edge_gate_convolution.1} parent=11 // pred_check_branch
          %355 = sbr.rel (%p353) target = $region36
        $region35: #{edge_gate_convolution.1} parent=11 // pred_region
          _
        $region36: #{edge_gate_convolution.1} parent=11 // pred_fallthru
          _
        // Predicated region
        $region37: #{edge_gate_convolution.1} parent=11 // pred_check
          %p356 = pneg %p250
        $region38: #{edge_gate_convolution.1} parent=11 // pred_check_branch
          %358 = sbr.rel (%p356) target = $region40
        $region39: #{edge_gate_convolution.1} parent=11 // pred_region
          _
        $region40: #{edge_gate_convolution.1} parent=11 // pred_fallthru
          _
        // Predicated region
        $region41: #{edge_gate_convolution.1} parent=11 // pred_check
          %p359 = pneg %p271
        $region42: #{edge_gate_convolution.1} parent=11 // pred_check_branch
          %361 = sbr.rel (%p359) target = $region44
        $region43: #{edge_gate_convolution.1} parent=11 // pred_region
          _
        $region44: #{edge_gate_convolution.1} parent=11 // pred_fallthru
          _
      $region12: #{edge_gate_convolution.1} parent=5 // pred_fallthru
        _
      %p362 = scmp.lt.s32.totalorder %s25, 4
      // Predicated region
      $region45: #{edge_gate_convolution.1} parent=5 // pred_check
        %p363 = pneg %p362
      $region46: #{edge_gate_convolution.1} parent=5 // pred_check_branch
        %365 = sbr.rel (%p363) target = $region48
      $region47: #{edge_gate_convolution.1} parent=5 // pred_region
        // Predicated region
        $region49: #{edge_gate_convolution.1} parent=47 // pred_check
          %p366 = pneg %p45
        $region50: #{edge_gate_convolution.1} parent=47 // pred_check_branch
          %368 = sbr.rel (%p366) target = $region52
        $region51: #{edge_gate_convolution.1} parent=47 // pred_region
          %p369 = scmp.lt.s32.totalorder %s25, 3
          %s370 = scalar_select %p369, %s25, 3
          %s371 = smul.addr %s370, 8
          %s372 = scalar_lea.vmem %s0, %s371
        $region52: #{edge_gate_convolution.1} parent=47 // pred_fallthru
          _
        // Predicated region
        $region53: #{edge_gate_convolution.1} parent=47 // pred_check
          %p373 = pneg %p71
        $region54: #{edge_gate_convolution.1} parent=47 // pred_check_branch
          %375 = sbr.rel (%p373) target = $region56
        $region55: #{edge_gate_convolution.1} parent=47 // pred_region
          %p376 = scmp.lt.s32.totalorder %s25, 3
          %s377 = scalar_select %p376, %s25, 3
          %s378 = smul.addr %s377, 2
          %s379 = smul.addr %s378, 8
          %s380 = scalar_lea.vmem %s1, %s379
        $region56: #{edge_gate_convolution.1} parent=47 // pred_fallthru
          _
        // Predicated region
        $region57: #{edge_gate_convolution.1} parent=47 // pred_check
          %p381 = pneg %p97
        $region58: #{edge_gate_convolution.1} parent=47 // pred_check_branch
          %383 = sbr.rel (%p381) target = $region60
        $region59: #{edge_gate_convolution.1} parent=47 // pred_region
          %p384 = scmp.lt.s32.totalorder %s25, 3
          %s385 = scalar_select %p384, %s25, 3
          %s386 = smul.addr %s385, 2
          %s387 = smul.addr %s386, 4
          %s388 = scalar_lea.vmem %s2, %s387
        $region60: #{edge_gate_convolution.1} parent=47 // pred_fallthru
          _
      $region48: #{edge_gate_convolution.1} parent=5 // pred_fallthru
        _
      %p389 = scmp.le.s32.totalorder 1, %s25
      %p390 = scmp.lt.s32.totalorder %s25, 5
      %p391 = pnand %p389, %p390
      %p392 = pneg %p391
      // Predicated region
      $region61: #{edge_gate_convolution.1} parent=5 // pred_check
        _
      $region62: #{edge_gate_convolution.1} parent=5 // pred_check_branch
        %394 = sbr.rel (%p391) target = $region64
      $region63: #{edge_gate_convolution.1} parent=5 // pred_region
        %s395 = ssub.s32 %s25, 1
        %p396 = scmp.lt.s32.totalorder %s30, 3
        %s397 = scalar_select %p396, %s30, 3
        %s398 = smul.addr %s397, 8
        %s399 = scalar_lea.vmem %s0, %s398
        %p400 = pneg %p51
        %p401 = pneg %p48
        %p402 = scmp.lt.s32.totalorder %s30, 3
        %s403 = scalar_select %p402, %s30, 3
        %s404 = smul.addr %s403, 2
        %s405 = smul.addr %s404, 8
        %s406 = scalar_lea.vmem %s1, %s405
        %p407 = pneg %p77
        %p408 = pneg %p74
        %p409 = scmp.lt.s32.totalorder %s30, 3
        %s410 = scalar_select %p409, %s30, 3
        %s411 = smul.addr %s410, 2
        %s412 = smul.addr %s411, 4
        %s413 = scalar_lea.vmem %s2, %s412
        %p414 = pneg %p103
        %p415 = pneg %p100
        %p416 = pneg %p124
        %p417 = pneg %p121
        %p418 = pneg %p145
        %p419 = pneg %p142
        %p420 = pneg %p166
        %p421 = pneg %p163
        %p422 = pneg %p187
        %p423 = pneg %p184
        %p424 = pneg %p208
        %p425 = pneg %p205
        %p426 = pneg %p229
        %p427 = pneg %p226
        %p428 = pneg %p250
        %p429 = pneg %p247
        %p430 = pneg %p271
        %p431 = pneg %p268
        %p432 = pneg %p297
        %p433 = pneg %p294
        %s434 = sand.u32 %s284, 1
        %s435 = scalar_lea.sflag [#allocation3], %s434
        %s436 = sand.u32 %s284, 1
        %s437 = smul.addr %s436, 8
        %s438 = scalar_lea.vmem [#allocation2], %s437
        %p439 = pneg %p323
        %p440 = pneg %p320
        %s441 = sand.u32 %s310, 1
        %s442 = scalar_lea.sflag [#allocation5], %s441
        %s443 = sand.u32 %s310, 1
        %s444 = smul.addr %s443, 16
        %s445 = scalar_lea.vmem [#allocation4], %s444
        %p446 = scmp.lt.s32.totalorder %s30, 3
        %s447 = scalar_select %p446, %s30, 3
        %s448 = smul.addr %s447, 8
        %s449 = scalar_lea.vmem %s0, %s448
        %p450 = scmp.lt.s32.totalorder %s30, 3
        %s451 = scalar_select %p450, %s30, 3
        %s452 = smul.addr %s451, 2
        %s453 = smul.addr %s452, 8
        %s454 = scalar_lea.vmem %s1, %s453
        %p455 = scmp.lt.s32.totalorder %s30, 3
        %s456 = scalar_select %p455, %s30, 3
        %s457 = smul.addr %s456, 2
        %s458 = smul.addr %s457, 4
        %s459 = scalar_lea.vmem %s2, %s458
        %v461 = vld [vmem:[%s449] sm:$0xff]
        %v462 = vld [vmem:[%s454] sm:$0xff]
        %v463 = vld [vmem:[%s454 + $0x8] sm:$0xff]
        %v464 = vld [vmem:[%s459] sm:$0xf]
        %v465 = vld [vmem:[%s459 + $0x4] sm:$0xf]
        %v466 = vpack.c.bf16 %v461, %v461
        %v467 = vld [vmem:[%s3] sm:$0xff]
        %v468 = vld [vmem:[%s3 + $0x8] sm:$0xff]
        %v469 = vld [vmem:[%s3 + $0x10] sm:$0xff]
        %v470 = vld [vmem:[%s3 + $0x18] sm:$0xff]
        %v471 = vld [vmem:[%s3 + $0x20] sm:$0xff]
        %v472 = vld [vmem:[%s3 + $0x28] sm:$0xff]
        %v473 = vld [vmem:[%s3 + $0x30] sm:$0xff]
        %v474 = vld [vmem:[%s3 + $0x38] sm:$0xff]
        %v475 = vld [vmem:[%s3 + $0x40] sm:$0xff]
        %v476 = vld [vmem:[%s3 + $0x48] sm:$0xff]
        %v477 = vld [vmem:[%s3 + $0x50] sm:$0xff]
        %v478 = vld [vmem:[%s3 + $0x58] sm:$0xff]
        %v479 = vld [vmem:[%s3 + $0x60] sm:$0xff]
        %v480 = vld [vmem:[%s3 + $0x68] sm:$0xff]
        %v481 = vld [vmem:[%s3 + $0x70] sm:$0xff]
        %v482 = vld [vmem:[%s3 + $0x78] sm:$0xff]
        %v483 = vld [vmem:[%s3 + $0x80] sm:$0xff]
        %v484 = vld [vmem:[%s3 + $0x88] sm:$0xff]
        %v485 = vld [vmem:[%s3 + $0x90] sm:$0xff]
        %v486 = vld [vmem:[%s3 + $0x98] sm:$0xff]
        %v487 = vld [vmem:[%s3 + $0xa0] sm:$0xff]
        %v488 = vld [vmem:[%s3 + $0xa8] sm:$0xff]
        %v489 = vld [vmem:[%s3 + $0xb0] sm:$0xff]
        %v490 = vld [vmem:[%s3 + $0xb8] sm:$0xff]
        %v491 = vld [vmem:[%s3 + $0xc0] sm:$0xff]
        %v492 = vld [vmem:[%s3 + $0xc8] sm:$0xff]
        %v493 = vld [vmem:[%s3 + $0xd0] sm:$0xff]
        %v494 = vld [vmem:[%s3 + $0xd8] sm:$0xff]
        %v495 = vld [vmem:[%s3 + $0xe0] sm:$0xff]
        %v496 = vld [vmem:[%s3 + $0xe8] sm:$0xff]
        %v497 = vld [vmem:[%s3 + $0xf0] sm:$0xff]
        %v498 = vld [vmem:[%s3 + $0xf8] sm:$0xff]
        %v499 = vld [vmem:[%s4] sm:$0xf]
        %v501 = vlaneseq
        %v502 = vshrl.u32 %v501, 7
        %v503 = vsub.s32 0, %v502
        %v504 = vrot.slane %v499, %v503
        %v505 = vlaneseq
        %v506 = vshrl.u32 %v505, 7
        %v507 = vsub.s32 1, %v506
        %v508 = vrot.slane %v499, %v507
        %v509 = vlaneseq
        %v510 = vshrl.u32 %v509, 7
        %v511 = vsub.s32 2, %v510
        %v512 = vrot.slane %v499, %v511
        %v513 = vlaneseq
        %v514 = vshrl.u32 %v513, 7
        %v515 = vsub.s32 3, %v514
        %v516 = vrot.slane %v499, %v515
        %v553 = vunpack.c.l.b16 %v467
        %v554 = vunpack.c.h.b16 %v467
        %v555 = vunpack.c.l.b16 %v468
        %v556 = vunpack.c.h.b16 %v468
        %v557 = vunpack.c.l.b16 %v469
        %v558 = vunpack.c.h.b16 %v469
        %v559 = vunpack.c.l.b16 %v470
        %v560 = vunpack.c.h.b16 %v470
        %v561 = vunpack.c.l.b16 %v471
        %v562 = vunpack.c.h.b16 %v471
        %v563 = vunpack.c.l.b16 %v472
        %v564 = vunpack.c.h.b16 %v472
        %v565 = vunpack.c.l.b16 %v473
        %v566 = vunpack.c.h.b16 %v473
        %v567 = vunpack.c.l.b16 %v474
        %v568 = vunpack.c.h.b16 %v474
        %v569 = vunpack.c.l.b16 %v475
        %v570 = vunpack.c.h.b16 %v475
        %v571 = vunpack.c.l.b16 %v476
        %v572 = vunpack.c.h.b16 %v476
        %v573 = vunpack.c.l.b16 %v477
        %v574 = vunpack.c.h.b16 %v477
        %v575 = vunpack.c.l.b16 %v478
        %v576 = vunpack.c.h.b16 %v478
        %v577 = vunpack.c.l.b16 %v479
        %v578 = vunpack.c.h.b16 %v479
        %v579 = vunpack.c.l.b16 %v480
        %v580 = vunpack.c.h.b16 %v480
        %v581 = vunpack.c.l.b16 %v481
        %v582 = vunpack.c.h.b16 %v481
        %v583 = vunpack.c.l.b16 %v482
        %v584 = vunpack.c.h.b16 %v482
        %v585 = vunpack.c.l.b16 %v483
        %v586 = vunpack.c.h.b16 %v483
        %v587 = vunpack.c.l.b16 %v484
        %v588 = vunpack.c.h.b16 %v484
        %v589 = vunpack.c.l.b16 %v485
        %v590 = vunpack.c.h.b16 %v485
        %v591 = vunpack.c.l.b16 %v486
        %v592 = vunpack.c.h.b16 %v486
        %v593 = vunpack.c.l.b16 %v487
        %v594 = vunpack.c.h.b16 %v487
        %v595 = vunpack.c.l.b16 %v488
        %v596 = vunpack.c.h.b16 %v488
        %v597 = vunpack.c.l.b16 %v489
        %v598 = vunpack.c.h.b16 %v489
        %v599 = vunpack.c.l.b16 %v490
        %v600 = vunpack.c.h.b16 %v490
        %v601 = vunpack.c.l.b16 %v491
        %v602 = vunpack.c.h.b16 %v491
        %v603 = vunpack.c.l.b16 %v492
        %v604 = vunpack.c.h.b16 %v492
        %v605 = vunpack.c.l.b16 %v493
        %v606 = vunpack.c.h.b16 %v493
        %v607 = vunpack.c.l.b16 %v494
        %v608 = vunpack.c.h.b16 %v494
        %v609 = vunpack.c.l.b16 %v495
        %v610 = vunpack.c.h.b16 %v495
        %v611 = vunpack.c.l.b16 %v496
        %v612 = vunpack.c.h.b16 %v496
        %v613 = vunpack.c.l.b16 %v497
        %v614 = vunpack.c.h.b16 %v497
        %v615 = vunpack.c.l.b16 %v498
        %v616 = vunpack.c.h.b16 %v498
        %v617 = vpack.c.b16 %v557, %v553
        %v618 = vpack.c.b16 %v558, %v554
        %v619 = vpack.c.b16 %v559, %v555
        %v620 = vpack.c.b16 %v560, %v556
        %v621 = vpack.c.b16 %v565, %v561
        %v622 = vpack.c.b16 %v566, %v562
        %v623 = vpack.c.b16 %v567, %v563
        %v624 = vpack.c.b16 %v568, %v564
        %v625 = vpack.c.b16 %v573, %v569
        %v626 = vpack.c.b16 %v574, %v570
        %v627 = vpack.c.b16 %v575, %v571
        %v628 = vpack.c.b16 %v576, %v572
        %v629 = vpack.c.b16 %v581, %v577
        %v630 = vpack.c.b16 %v582, %v578
        %v631 = vpack.c.b16 %v583, %v579
        %v632 = vpack.c.b16 %v584, %v580
        %v633 = vpack.c.b16 %v589, %v585
        %v634 = vpack.c.b16 %v590, %v586
        %v635 = vpack.c.b16 %v591, %v587
        %v636 = vpack.c.b16 %v592, %v588
        %v637 = vpack.c.b16 %v597, %v593
        %v638 = vpack.c.b16 %v598, %v594
        %v639 = vpack.c.b16 %v599, %v595
        %v640 = vpack.c.b16 %v600, %v596
        %v641 = vpack.c.b16 %v605, %v601
        %v642 = vpack.c.b16 %v606, %v602
        %v643 = vpack.c.b16 %v607, %v603
        %v644 = vpack.c.b16 %v608, %v604
        %v645 = vpack.c.b16 %v613, %v609
        %v646 = vpack.c.b16 %v614, %v610
        %v647 = vpack.c.b16 %v615, %v611
        %v648 = vpack.c.b16 %v616, %v612
        %681 = vmatprep.subr.bf16.mxu0 %v618
        %682 = vmatpush1.bf16.msra.mxu0 %v617
        %683 = vmatprep.subr.bf16.mxu0 %v622
        %684 = vmatpush1.bf16.msra.mxu0 %v621
        %685 = vmatprep.subr.bf16.mxu0 %v626
        %686 = vmatpush1.bf16.msra.mxu0 %v625
        %687 = vmatprep.subr.bf16.mxu0 %v630
        %688 = vmatpush1.bf16.msra.mxu0 %v629
        %689 = vmatprep.subr.bf16.mxu0 %v634
        %690 = vmatpush1.bf16.msra.mxu0 %v633
        %691 = vmatprep.subr.bf16.mxu0 %v638
        %692 = vmatpush1.bf16.msra.mxu0 %v637
        %693 = vmatprep.subr.bf16.mxu0 %v642
        %694 = vmatpush1.bf16.msra.mxu0 %v641
        %695 = vmatprep.subr.bf16.mxu0 %v646
        %696 = vmatpush1.bf16.msra.mxu0 %v645
        %697 = vmatprep.subr.bf16.mxu0 0
        %698 = vmatpush1.bf16.msra.mxu0 0
        %699 = vmatprep.subr.bf16.mxu0 0
        %700 = vmatpush1.bf16.msra.mxu0 0
        %701 = vmatprep.subr.bf16.mxu0 0
        %702 = vmatpush1.bf16.msra.mxu0 0
        %703 = vmatprep.subr.bf16.mxu0 0
        %704 = vmatpush1.bf16.msra.mxu0 0
        %705 = vmatprep.subr.bf16.mxu0 0
        %706 = vmatpush1.bf16.msra.mxu0 0
        %707 = vmatprep.subr.bf16.mxu0 0
        %708 = vmatpush1.bf16.msra.mxu0 0
        %709 = vmatprep.subr.bf16.mxu0 0
        %710 = vmatpush1.bf16.msra.mxu0 0
        %711 = vmatprep.subr.bf16.mxu0 0
        %712 = vmatpush1.bf16.msra.mxu0 0
        %713 = vmatprep.mubr.bf16.mxu0 0
        %714 = vmatmul.mubr.bf16.gmra.mrb[0].mxu0 %v466
        %v715 = vpop.f32.mrb[0].mxu0
        %v716 = vadd.f32 %v504, %v715
        %v717 = vpop.f32.mrb[0].mxu0
        %v718 = vadd.f32 %v508, %v717
        %v719 = vpop.f32.mrb[0].mxu0
        %v720 = vpop.f32.mrb[0].mxu0
        %721 = vdwg.mxu0
        %722 = vmatprep.subr.bf16.mxu0 %v620
        %723 = vmatpush1.bf16.msra.mxu0 %v619
        %724 = vmatprep.subr.bf16.mxu0 %v624
        %725 = vmatpush1.bf16.msra.mxu0 %v623
        %726 = vmatprep.subr.bf16.mxu0 %v628
        %727 = vmatpush1.bf16.msra.mxu0 %v627
        %728 = vmatprep.subr.bf16.mxu0 %v632
        %729 = vmatpush1.bf16.msra.mxu0 %v631
        %730 = vmatprep.subr.bf16.mxu0 %v636
        %731 = vmatpush1.bf16.msra.mxu0 %v635
        %732 = vmatprep.subr.bf16.mxu0 %v640
        %733 = vmatpush1.bf16.msra.mxu0 %v639
        %734 = vmatprep.subr.bf16.mxu0 %v644
        %735 = vmatpush1.bf16.msra.mxu0 %v643
        %736 = vmatprep.subr.bf16.mxu0 %v648
        %737 = vmatpush1.bf16.msra.mxu0 %v647
        %738 = vmatprep.subr.bf16.mxu0 0
        %739 = vmatpush1.bf16.msra.mxu0 0
        %740 = vmatprep.subr.bf16.mxu0 0
        %741 = vmatpush1.bf16.msra.mxu0 0
        %742 = vmatprep.subr.bf16.mxu0 0
        %743 = vmatpush1.bf16.msra.mxu0 0
        %744 = vmatprep.subr.bf16.mxu0 0
        %745 = vmatpush1.bf16.msra.mxu0 0
        %746 = vmatprep.subr.bf16.mxu0 0
        %747 = vmatpush1.bf16.msra.mxu0 0
        %748 = vmatprep.subr.bf16.mxu0 0
        %749 = vmatpush1.bf16.msra.mxu0 0
        %750 = vmatprep.subr.bf16.mxu0 0
        %751 = vmatpush1.bf16.msra.mxu0 0
        %752 = vmatprep.subr.bf16.mxu0 0
        %753 = vmatpush1.bf16.msra.mxu0 0
        %754 = vmatprep.mubr.bf16.mxu0 0
        %755 = vmatmul.mubr.bf16.gmra.mrb[0].mxu0 %v466
        %v756 = vpop.f32.mrb[0].mxu0
        %v757 = vadd.f32 %v512, %v756
        %v758 = vpop.f32.mrb[0].mxu0
        %v759 = vadd.f32 %v516, %v758
        %v760 = vpop.f32.mrb[0].mxu0
        %v761 = vpop.f32.mrb[0].mxu0
        %762 = vdwg.mxu0
        %v763 = vpack.c.bf16 %v757, %v716
        %v764 = vpack.c.bf16 0.0, %v718
        %v767 = vunpack.c.l.b16 %v464
        %v768 = vunpack.c.l.b16 %v465
        %v769 = vpack.c.b16 %v768, %v767
        %vm770 = vcmask 130048
        %v772 = vsel %vm770, %v769, 0
        %774 = vmatprep.subr.bf16.mxu0 %v764
        %775 = vmatpush1.bf16.msra.mxu0 %v763
        %776 = vmatprep.subr.bf16.mxu0 0
        %777 = vmatpush1.bf16.msra.mxu0 0
        %778 = vmatprep.subr.bf16.mxu0 0
        %779 = vmatpush1.bf16.msra.mxu0 0
        %780 = vmatprep.subr.bf16.mxu0 0
        %781 = vmatpush1.bf16.msra.mxu0 0
        %782 = vmatprep.subr.bf16.mxu0 0
        %783 = vmatpush1.bf16.msra.mxu0 0
        %784 = vmatprep.subr.bf16.mxu0 0
        %785 = vmatpush1.bf16.msra.mxu0 0
        %786 = vmatprep.subr.bf16.mxu0 0
        %787 = vmatpush1.bf16.msra.mxu0 0
        %788 = vmatprep.subr.bf16.mxu0 0
        %789 = vmatpush1.bf16.msra.mxu0 0
        %790 = vmatprep.subr.bf16.mxu0 0
        %791 = vmatpush1.bf16.msra.mxu0 0
        %792 = vmatprep.subr.bf16.mxu0 0
        %793 = vmatpush1.bf16.msra.mxu0 0
        %794 = vmatprep.subr.bf16.mxu0 0
        %795 = vmatpush1.bf16.msra.mxu0 0
        %796 = vmatprep.subr.bf16.mxu0 0
        %797 = vmatpush1.bf16.msra.mxu0 0
        %798 = vmatprep.subr.bf16.mxu0 0
        %799 = vmatpush1.bf16.msra.mxu0 0
        %800 = vmatprep.subr.bf16.mxu0 0
        %801 = vmatpush1.bf16.msra.mxu0 0
        %802 = vmatprep.subr.bf16.mxu0 0
        %803 = vmatpush1.bf16.msra.mxu0 0
        %804 = vmatprep.subr.bf16.mxu0 0
        %805 = vmatpush1.bf16.msra.mxu0 0
        %806 = vmatprep.mubr.bf16.mxu0 0
        %807 = vmatmul.mubr.bf16.gmra.mrb[0].mxu0 %v772
        %v808 = vpop.f32.mrb[0].mxu0
        %v809 = vadd.f32 0.0, %v808
        %v810 = vpop.f32.mrb[0].mxu0
        %v811 = vadd.f32 0.0, %v810
        %v812 = vpop.f32.mrb[0].mxu0
        %v813 = vadd.f32 0.0, %v812
        %v814 = vpop.f32.mrb[0].mxu0
        %v815 = vadd.f32 0.0, %v814
        %816 = vdwg.mxu0
        %v817 = vpack.c.bf16 %v463, %v462
        %v818 = vld [vmem:[%s5] sm:$0xf]
        %v819 = vld [vmem:[%s5 + $0x4] sm:$0xf]
        %v820 = vld [vmem:[%s5 + $0x8] sm:$0xf]
        %v821 = vld [vmem:[%s5 + $0xc] sm:$0xf]
        %v822 = vld [vmem:[%s5 + $0x10] sm:$0xf]
        %v823 = vld [vmem:[%s5 + $0x14] sm:$0xf]
        %v824 = vld [vmem:[%s5 + $0x18] sm:$0xf]
        %v825 = vld [vmem:[%s5 + $0x1c] sm:$0xf]
        %v826 = vld [vmem:[%s5 + $0x20] sm:$0xf]
        %v827 = vld [vmem:[%s5 + $0x24] sm:$0xf]
        %v828 = vld [vmem:[%s5 + $0x28] sm:$0xf]
        %v829 = vld [vmem:[%s5 + $0x2c] sm:$0xf]
        %v830 = vld [vmem:[%s5 + $0x30] sm:$0xf]
        %v831 = vld [vmem:[%s5 + $0x34] sm:$0xf]
        %v832 = vld [vmem:[%s5 + $0x38] sm:$0xf]
        %v833 = vld [vmem:[%s5 + $0x3c] sm:$0xf]
        %v834 = vld [vmem:[%s6] sm:$0x1]
        %v836 = vlaneseq
        %v837 = vshrl.u32 %v836, 7
        %v838 = vsub.s32 0, %v837
        %v839 = vrot.slane %v834, %v838
        %v857 = vunpack.c.l.b16 %v818
        %v858 = vunpack.c.l.b16 %v819
        %v859 = vunpack.c.l.b16 %v820
        %v860 = vunpack.c.l.b16 %v821
        %v861 = vunpack.c.l.b16 %v822
        %v862 = vunpack.c.l.b16 %v823
        %v863 = vunpack.c.l.b16 %v824
        %v864 = vunpack.c.l.b16 %v825
        %v865 = vunpack.c.l.b16 %v826
        %v866 = vunpack.c.l.b16 %v827
        %v867 = vunpack.c.l.b16 %v828
        %v868 = vunpack.c.l.b16 %v829
        %v869 = vunpack.c.l.b16 %v830
        %v870 = vunpack.c.l.b16 %v831
        %v871 = vunpack.c.l.b16 %v832
        %v872 = vunpack.c.l.b16 %v833
        %v873 = vpack.c.b16 %v858, %v857
        %v874 = vpack.c.b16 %v860, %v859
        %v875 = vpack.c.b16 %v862, %v861
        %v876 = vpack.c.b16 %v864, %v863
        %v877 = vpack.c.b16 %v866, %v865
        %v878 = vpack.c.b16 %v868, %v867
        %v879 = vpack.c.b16 %v870, %v869
        %v880 = vpack.c.b16 %v872, %v871
        %889 = vmatprep.subr.bf16.mxu0 0
        %890 = vmatpush1.bf16.msra.mxu0 %v873
        %891 = vmatprep.subr.bf16.mxu0 0
        %892 = vmatpush1.bf16.msra.mxu0 %v874
        %893 = vmatprep.subr.bf16.mxu0 0
        %894 = vmatpush1.bf16.msra.mxu0 %v875
        %895 = vmatprep.subr.bf16.mxu0 0
        %896 = vmatpush1.bf16.msra.mxu0 %v876
        %897 = vmatprep.subr.bf16.mxu0 0
        %898 = vmatpush1.bf16.msra.mxu0 %v877
        %899 = vmatprep.subr.bf16.mxu0 0
        %900 = vmatpush1.bf16.msra.mxu0 %v878
        %901 = vmatprep.subr.bf16.mxu0 0
        %902 = vmatpush1.bf16.msra.mxu0 %v879
        %903 = vmatprep.subr.bf16.mxu0 0
        %904 = vmatpush1.bf16.msra.mxu0 %v880
        %905 = vmatprep.subr.bf16.mxu0 0
        %906 = vmatpush1.bf16.msra.mxu0 0
        %907 = vmatprep.subr.bf16.mxu0 0
        %908 = vmatpush1.bf16.msra.mxu0 0
        %909 = vmatprep.subr.bf16.mxu0 0
        %910 = vmatpush1.bf16.msra.mxu0 0
        %911 = vmatprep.subr.bf16.mxu0 0
        %912 = vmatpush1.bf16.msra.mxu0 0
        %913 = vmatprep.subr.bf16.mxu0 0
        %914 = vmatpush1.bf16.msra.mxu0 0
        %915 = vmatprep.subr.bf16.mxu0 0
        %916 = vmatpush1.bf16.msra.mxu0 0
        %917 = vmatprep.subr.bf16.mxu0 0
        %918 = vmatpush1.bf16.msra.mxu0 0
        %919 = vmatprep.subr.bf16.mxu0 0
        %920 = vmatpush1.bf16.msra.mxu0 0
        %921 = vmatprep.mubr.bf16.mxu0 0
        %922 = vmatmul.mubr.bf16.gmra.mrb[0].mxu0 %v817
        %v923 = vpop.f32.mrb[0].mxu0
        %v924 = vadd.f32 %v839, %v923
        %v925 = vpop.f32.mrb[0].mxu0
        %v926 = vpop.f32.mrb[0].mxu0
        %v927 = vadd.f32 %v839, %v926
        %v928 = vpop.f32.mrb[0].mxu0
        %929 = vdwg.mxu0
        %v930 = vadd.f32 %v924, %v809
        %v931 = vadd.f32 %v927, %v813
        %v932 = vxor.u32 %v930, 2147483648
        %v933 = vxor.u32 %v931, 2147483648
        %v934 = vmul.f32 %v932, 1.442695
        %v935 = vpow.pop %v934
        %v936 = vmul.f32 %v933, 1.442695
        %v937 = vpow.pop %v936
        %v938 = vadd.f32 %v935, 1.0
        %v939 = vadd.f32 %v937, 1.0
        %v940 = vrcp.pop %v938
        %v941 = vmul.f32 1.0, %v940
        %v942 = vrcp.pop %v939
        %v943 = vmul.f32 1.0, %v942
        %v944 = vmul.f32 %v811, %v941
        %v945 = vmul.f32 %v815, %v943
        %v946 = vpack.c.bf16 %v945, %v944
        %v947 = vpack.c.bf16 %v943, %v941
        %948 = vrot.lane.b32.xlu0 %v769, 120
        %v949 = vpop.permute.xlu0 %948
        %951 = vxpose.xlu0.c.b16.start [1/8] %v949, 128
        %952 = vxpose.xlu0.c.b16.cont [2/8] 0, 128
        %953 = vxpose.xlu0.c.b16.cont [3/8] 0, 128
        %954 = vxpose.xlu0.c.b16.cont [4/8] 0, 128
        %955 = vxpose.xlu0.c.b16.cont [5/8] 0, 128
        %956 = vxpose.xlu0.c.b16.cont [6/8] 0, 128
        %957 = vxpose.xlu0.c.b16.cont [7/8] 0, 128
        %958 = vxpose.xlu0.c.b16.end [8/8] 0, 128
        %v959 = vpop.trf.xlu0
        %v960 = vpop.trf.xlu0
        %v961 = vpop.trf.xlu0
        %v962 = vpop.trf.xlu0
        %v963 = vpop.trf.xlu0
        %v964 = vpop.trf.xlu0
        %v965 = vpop.trf.xlu0
        %v966 = vpop.trf.xlu0
        %v968 = vsel %vm770, %v959, 0
        %970 = vmatprep.subr.bf16.mxu0 %v947
        %971 = vmatpush1.bf16.msra.mxu0 %v946
        %972 = vmatprep.subr.bf16.mxu0 0
        %973 = vmatpush1.bf16.msra.mxu0 0
        %974 = vmatprep.subr.bf16.mxu0 0
        %975 = vmatpush1.bf16.msra.mxu0 0
        %976 = vmatprep.subr.bf16.mxu0 0
        %977 = vmatpush1.bf16.msra.mxu0 0
        %978 = vmatprep.subr.bf16.mxu0 0
        %979 = vmatpush1.bf16.msra.mxu0 0
        %980 = vmatprep.subr.bf16.mxu0 0
        %981 = vmatpush1.bf16.msra.mxu0 0
        %982 = vmatprep.subr.bf16.mxu0 0
        %983 = vmatpush1.bf16.msra.mxu0 0
        %984 = vmatprep.subr.bf16.mxu0 0
        %985 = vmatpush1.bf16.msra.mxu0 0
        %986 = vmatprep.subr.bf16.mxu0 0
        %987 = vmatpush1.bf16.msra.mxu0 0
        %988 = vmatprep.subr.bf16.mxu0 0
        %989 = vmatpush1.bf16.msra.mxu0 0
        %990 = vmatprep.subr.bf16.mxu0 0
        %991 = vmatpush1.bf16.msra.mxu0 0
        %992 = vmatprep.subr.bf16.mxu0 0
        %993 = vmatpush1.bf16.msra.mxu0 0
        %994 = vmatprep.subr.bf16.mxu0 0
        %995 = vmatpush1.bf16.msra.mxu0 0
        %996 = vmatprep.subr.bf16.mxu0 0
        %997 = vmatpush1.bf16.msra.mxu0 0
        %998 = vmatprep.subr.bf16.mxu0 0
        %999 = vmatpush1.bf16.msra.mxu0 0
        %1000 = vmatprep.subr.bf16.mxu0 0
        %1001 = vmatpush1.bf16.msra.mxu0 0
        %1002 = vmatprep.mubr.bf16.mxu0 0
        %1003 = vmatmul.mubr.bf16.gmra.mrb[0].mxu0 %v968
        %v1004 = vpop.f32.mrb[0].mxu0
        %v1005 = vadd.f32 0.0, %v1004
        %v1006 = vpop.f32.mrb[0].mxu0
        %v1007 = vadd.f32 0.0, %v1006
        %v1008 = vpop.f32.mrb[0].mxu0
        %v1009 = vpop.f32.mrb[0].mxu0
        %1010 = vdwg.mxu0
        %v1011 = vadd.f32 %v1007, 1e-06
        %v1012 = vrcp.pop %v1011
        %v1013 = vmul.f32 %v1005, %v1012
        %v1014 = vadd.f32 %v759, %v1013
        %v1015 = vld [vmem:[%s7] sm:$0x1]
        %v1016 = vld [vmem:[%s8] sm:$0x1]
        %v1017 = vadd.f32 %v930, %v931
        %v1018 = vrot.slane %v1017, 4
        %v1019 = vadd.f32 %v1017, %v1018
        %v1020 = vrot.slane %v1019, 2
        %v1021 = vadd.f32 %v1019, %v1020
        %v1022 = vrot.slane %v1021, 1
        %v1023 = vadd.f32 %v1021, %v1022
        %v1024 = vmul.f32 %v930, %v930
        %v1025 = vmul.f32 %v931, %v931
        %v1026 = vadd.f32 %v1024, %v1025
        %v1027 = vrot.slane %v1026, 4
        %v1028 = vadd.f32 %v1026, %v1027
        %v1029 = vrot.slane %v1028, 2
        %v1030 = vadd.f32 %v1028, %v1029
        %v1031 = vrot.slane %v1030, 1
        %v1032 = vadd.f32 %v1030, %v1031
        %v1033 = vmul.f32 %v1023, 0.0625
        %v1034 = vmul.f32 %v1032, 0.0625
        %v1035 = vmul.f32 %v1033, %v1033
        %v1036 = vsub.f32 %v1034, %v1035
        %v1037 = vsub.f32 %v930, %v1033
        %v1038 = vsub.f32 %v931, %v1033
        %v1040 = vlaneseq
        %v1041 = vshrl.u32 %v1040, 7
        %v1042 = vsub.s32 0, %v1041
        %v1043 = vrot.slane %v1015, %v1042
        %v1045 = vmul.f32 %v1043, %v1037
        %v1046 = vmul.f32 %v1043, %v1038
        %v1047 = vadd.f32 %v1036, 1e-05
        %v1048 = vrsqrt.pop %v1047
        %v1049 = vmul.f32 %v1045, %v1048
        %v1050 = vmul.f32 %v1046, %v1048
        %v1052 = vlaneseq
        %v1053 = vshrl.u32 %v1052, 7
        %v1054 = vsub.s32 0, %v1053
        %v1055 = vrot.slane %v1016, %v1054
        %v1057 = vadd.f32 %v1049, %v1055
        %v1058 = vadd.f32 %v1050, %v1055
        %v1059 = vxor.u32 %v1057, 2147483648
        %v1060 = vxor.u32 %v1058, 2147483648
        %v1061 = vmul.f32 %v1059, 1.442695
        %v1062 = vpow.pop %v1061
        %v1063 = vmul.f32 %v1060, 1.442695
        %v1064 = vpow.pop %v1063
        %v1065 = vadd.f32 %v1062, 1.0
        %v1066 = vadd.f32 %v1064, 1.0
        %v1067 = vrcp.pop %v1065
        %v1068 = vmul.f32 1.0, %v1067
        %v1069 = vrcp.pop %v1066
        %v1070 = vmul.f32 1.0, %v1069
        %v1071 = vmul.f32 %v1057, %v1068
        %v1072 = vmul.f32 %v1058, %v1070
        %v1073 = vadd.f32 %v1071, %v462
        %v1074 = vadd.f32 %v1072, %v463
        %v1075 = vld [vmem:[%s9] sm:$0x1]
        %v1076 = vld [vmem:[%s10] sm:$0x1]
        %v1077 = vrot.slane %v1014, 4
        %v1078 = vadd.f32 %v1014, %v1077
        %v1079 = vrot.slane %v1078, 2
        %v1080 = vadd.f32 %v1078, %v1079
        %v1081 = vrot.slane %v1080, 1
        %v1082 = vadd.f32 %v1080, %v1081
        %v1083 = vmul.f32 %v1014, %v1014
        %v1084 = vrot.slane %v1083, 4
        %v1085 = vadd.f32 %v1083, %v1084
        %v1086 = vrot.slane %v1085, 2
        %v1087 = vadd.f32 %v1085, %v1086
        %v1088 = vrot.slane %v1087, 1
        %v1089 = vadd.f32 %v1087, %v1088
        %v1090 = vmul.f32 %v1082, 0.125
        %v1091 = vmul.f32 %v1089, 0.125
        %v1092 = vmul.f32 %v1090, %v1090
        %v1093 = vsub.f32 %v1091, %v1092
        %v1094 = vsub.f32 %v1014, %v1090
        %v1096 = vlaneseq
        %v1097 = vshrl.u32 %v1096, 7
        %v1098 = vsub.s32 0, %v1097
        %v1099 = vrot.slane %v1075, %v1098
        %v1101 = vmul.f32 %v1099, %v1094
        %v1102 = vadd.f32 %v1093, 1e-05
        %v1103 = vrsqrt.pop %v1102
        %v1104 = vmul.f32 %v1101, %v1103
        %v1106 = vlaneseq
        %v1107 = vshrl.u32 %v1106, 7
        %v1108 = vsub.s32 0, %v1107
        %v1109 = vrot.slane %v1076, %v1108
        %v1111 = vadd.f32 %v1104, %v1109
        %v1112 = vxor.u32 %v1111, 2147483648
        %v1113 = vmul.f32 %v1112, 1.442695
        %v1114 = vpow.pop %v1113
        %v1115 = vadd.f32 %v1114, 1.0
        %v1116 = vrcp.pop %v1115
        %v1117 = vmul.f32 1.0, %v1116
        %v1118 = vmul.f32 %v1111, %v1117
        %v1119 = vadd.f32 %v1118, %v461
        %1120 = vst [vmem:[%s438] sm:$0xff] %v1119
        %1121 = vst [vmem:[%s445] sm:$0xff] %v1073
        %1122 = vst [vmem:[%s445 + $0x8] sm:$0xff] %v1074
        %s1123 = sand.u32 %s284, 1
        %s1124 = scalar_lea.sflag [#allocation3], %s1123
        %s1125 = sand.u32 %s284, 1
        %s1126 = smul.addr %s1125, 8
        %s1127 = scalar_lea.vmem [#allocation2], %s1126
        %s1128 = sand.u32 %s310, 1
        %s1129 = scalar_lea.sflag [#allocation5], %s1128
        %s1130 = sand.u32 %s310, 1
        %s1131 = smul.addr %s1130, 16
        %s1132 = scalar_lea.vmem [#allocation4], %s1131
        // Predicated region
        $region65: #{edge_gate_convolution.1} parent=63 // pred_check
          %p1133 = pneg %p294
        $region66: #{edge_gate_convolution.1} parent=63 // pred_check_branch
          %1135 = sbr.rel (%p1133) target = $region68
        $region67: #{edge_gate_convolution.1} parent=63 // pred_region
          %s1137 = ssub.s32 128, 128
          %1138 = vsyncadd %s1124, %s1137
          %s1139 = smul.addr %s30, 128
          %s1140 = scalar_lea.hbm %s11, %s1139
          %s1142 = sshll.u32 %s1127, 4
          %s1143 = int_to_ptr.vmem [resolvable:$true] %s1142
          %1145 = dma.vmem_to_hbm [thread:$0]  %s1143, 128, %s1140, %s1124
        $region68: #{edge_gate_convolution.1} parent=63 // pred_fallthru
          _
        // Predicated region
        $region69: #{edge_gate_convolution.1} parent=63 // pred_check
          %p1146 = pneg %p320
        $region70: #{edge_gate_convolution.1} parent=63 // pred_check_branch
          %1148 = sbr.rel (%p1146) target = $region72
        $region71: #{edge_gate_convolution.1} parent=63 // pred_region
          %s1150 = ssub.s32 256, 256
          %1151 = vsyncadd %s1129, %s1150
          %s1152 = smul.addr %s30, 2
          %s1153 = smul.addr %s1152, 128
          %s1154 = scalar_lea.hbm %s12, %s1153
          %s1155 = sshll.u32 %s1132, 4
          %s1156 = int_to_ptr.vmem [resolvable:$true] %s1155
          %1161 = dma.vmem_to_hbm [thread:$0]  %s1156, 256, %s1154, %s1129, 128, 128, 8
        $region72: #{edge_gate_convolution.1} parent=63 // pred_fallthru
          _
      $region64: #{edge_gate_convolution.1} parent=5 // pred_fallthru
        _
      %p1162 = scmp.le.s32.totalorder 2, %s25
      // Predicated region
      $region73: #{edge_gate_convolution.1} parent=5 // pred_check
        %p1163 = pneg %p1162
      $region74: #{edge_gate_convolution.1} parent=5 // pred_check_branch
        %1165 = sbr.rel (%p1163) target = $region76
      $region75: #{edge_gate_convolution.1} parent=5 // pred_region
        %s1166 = ssub.s32 %s25, 2
        // Predicated region
        $region77: #{edge_gate_convolution.1} parent=75 // pred_check
          %p1167 = pneg %p300
        $region78: #{edge_gate_convolution.1} parent=75 // pred_check_branch
          %1169 = sbr.rel (%p1167) target = $region80
        $region79: #{edge_gate_convolution.1} parent=75 // pred_region
          %s1170 = sand.u32 %s285, 1
          %s1171 = scalar_lea.sflag [#allocation3], %s1170
          %s1172 = sand.u32 %s285, 1
          %s1173 = smul.addr %s1172, 8
          %s1174 = scalar_lea.vmem [#allocation2], %s1173
          %1175 = dma.done %s1171, 128
        $region80: #{edge_gate_convolution.1} parent=75 // pred_fallthru
          _
        // Predicated region
        $region81: #{edge_gate_convolution.1} parent=75 // pred_check
          %p1176 = pneg %p326
        $region82: #{edge_gate_convolution.1} parent=75 // pred_check_branch
          %1178 = sbr.rel (%p1176) target = $region84
        $region83: #{edge_gate_convolution.1} parent=75 // pred_region
          %s1179 = sand.u32 %s311, 1
          %s1180 = scalar_lea.sflag [#allocation5], %s1179
          %s1181 = sand.u32 %s311, 1
          %s1182 = smul.addr %s1181, 16
          %s1183 = scalar_lea.vmem [#allocation4], %s1182
          %1184 = dma.done %s1180, 256
        $region84: #{edge_gate_convolution.1} parent=75 // pred_fallthru
          _
      $region76: #{edge_gate_convolution.1} parent=5 // pred_fallthru
        _
    $region6: #{edge_gate_convolution.1} parent=1 // loop_footer
      %s29 = sadd.s32 1, %s25
    $region7: #{edge_gate_convolution.1} parent=1 // loop_footer_branch
      %24 = sbr.rel target = $region3
    $region8: #{edge_gate_convolution.1} parent=1 // loop_exit
      _
    %1185 = vsyncpa [#allocation3], 1
    %s1186 = scalar_lea.sflag [#allocation3], 1
    %1187 = vsyncpa %s1186, 1
    %1188 = vsyncpa [#allocation5], 1
    %s1189 = scalar_lea.sflag [#allocation5], 1
    %1190 = vsyncpa %s1189, 1

</llo_original>
